<compile_context>
chip_gen: v7x
topology: tpu7x:2x2x1
jax: 0.10.0
libtpu: 0.0.40
codegen_flags: <defaults>
</compile_context>

<pallas_src>
import functools

import jax
import jax.numpy as jnp
from jax.experimental import pallas as pl
from jax.experimental.pallas import tpu as pltpu


def _gat_fused_kernel(x_ref, w_ref, asrc_ref, adst_ref, adj_ref, bias_ref,
                      out_ref, *, heads, c):
    """All heads in one shot. Whole graph fits in VMEM (small N)."""
    # Fused linear transform for all heads: [N, IN] @ [IN, H*C]  (one MXU op)
    h_all = jnp.dot(x_ref[...], w_ref[...], preferred_element_type=jnp.float32)

    # Adjacency mask computed once, reused by every head.
    mask = adj_ref[...] > 0.0                                   # [N, N] (dst, src)

    head_outs = []
    for hh in range(heads):                                     # static unroll (4)
        h_h = h_all[:, hh * c:(hh + 1) * c]                     # [N, C] lane slice

        # Per-node attention logits for this head.
        a_src = jnp.sum(h_h * asrc_ref[hh:hh + 1, :], axis=-1, keepdims=True)  # [N,1]
        a_dst = jnp.sum(h_h * adst_ref[hh:hh + 1, :], axis=-1, keepdims=True)  # [N,1]

        # e[j, i] = LeakyReLU(a_dst[j] + a_src[i], 0.2), masked to edges.
        e = a_dst + jnp.transpose(a_src)                        # [N, N]
        e = jnp.maximum(e, 0.2 * e)                             # LeakyReLU (slope<1)
        e = jnp.where(mask, e, -1e30)

        # Softmax over sources i (last axis). Self-loops guarantee at least one
        # unmasked entry per row, so denom >= 1 and approx reciprocal is safe;
        # masked logits underflow to exactly 0 after max-subtraction + exp.
        e = e - jnp.max(e, axis=-1, keepdims=True)
        p = jnp.exp(e)
        denom = jnp.sum(p, axis=-1, keepdims=True)
        alpha = p * pl.reciprocal(denom, approx=True)           # [N, N]

        # Weighted aggregation: [N, N] @ [N, C] -> [N, C]  (MXU)
        head_outs.append(
            jnp.dot(alpha, h_h, preferred_element_type=jnp.float32))

    # Lane-dense [N, H*C] result written in a single unmasked store, plus bias.
    out = jnp.concatenate(head_outs, axis=-1) + bias_ref[...]
    out_ref[...] = out.astype(out_ref.dtype)


@functools.partial(jax.jit, static_argnames=("heads",))
def gat_forward(x, adj, weight, att_src, att_dst, bias, *, heads):
    """x: [N, IN] f32, adj: [N, N] (dst, src) f32 {0,1} incl. self-loops.

    weight:  [IN, H*C]   (heads concatenated along the output/lane axis)
    att_src: [H, C]
    att_dst: [H, C]
    bias:    [1, H*C]
    returns: [N, H*C]
    """
    n, in_dim = x.shape
    hc = weight.shape[-1]
    assert hc % heads == 0
    c = hc // heads

    kernel = functools.partial(_gat_fused_kernel, heads=heads, c=c)
    vmem = pl.BlockSpec(memory_space=pltpu.MemorySpace.VMEM)

    return pl.pallas_call(
        kernel,
        out_shape=jax.ShapeDtypeStruct((n, hc), jnp.float32),
        in_specs=[vmem] * 6,
        out_specs=vmem,
    )(x, weight, att_src, att_dst, adj, bias)


def build_dense_adj(edge_index, num_nodes):
    """edge_index: [2, E] int32 (row 0 = src, row 1 = dst), add self-loops."""
    src, dst = edge_index[0], edge_index[1]
    adj = jnp.zeros((num_nodes, num_nodes), dtype=jnp.float32)
    adj = adj.at[dst, src].set(1.0)                  # adj[dst, src] = 1
    adj = adj.at[jnp.arange(num_nodes), jnp.arange(num_nodes)].set(1.0)
    return adj


if __name__ == "__main__":
    # hparams: encoding_dim=32, embedding_dim=64, nb_attn_heads=4, dropout=0.5
    ENCODING_DIM = 32
    EMBEDDING_DIM = 64
    HEADS = 4
    OUT_PER_HEAD = EMBEDDING_DIM // HEADS            # 16
    N = 64                                           # number of nodes
    E = 256                                          # number of edges

    key = jax.random.PRNGKey(0)
    k_x, k_e, k_w, k_as, k_ad = jax.random.split(key, 5)

    # Inputs
    encodings = jax.random.normal(k_x, (N, ENCODING_DIM), dtype=jnp.float32)
    subnetwork = jax.random.randint(k_e, (2, E), 0, N, dtype=jnp.int32)  # edge_index

    # Deterministic parameter init (glorot-ish scaling), per-head shapes as in
    # GATConv.__init__, then packed for the fused kernel.
    w_scale = (6.0 / (ENCODING_DIM + HEADS * OUT_PER_HEAD)) ** 0.5
    weight_per_head = jax.random.uniform(
        k_w, (HEADS, ENCODING_DIM, OUT_PER_HEAD), jnp.float32, -w_scale, w_scale)
    a_scale = (6.0 / (1 + OUT_PER_HEAD)) ** 0.5
    att_src = jax.random.uniform(
        k_as, (HEADS, OUT_PER_HEAD), jnp.float32, -a_scale, a_scale)
    att_dst = jax.random.uniform(
        k_ad, (HEADS, OUT_PER_HEAD), jnp.float32, -a_scale, a_scale)
    bias = jnp.zeros((1, HEADS * OUT_PER_HEAD), dtype=jnp.float32)

    # Pack weights head-major along the output/lane axis: [IN, H*C]
    weight = jnp.transpose(weight_per_head, (1, 0, 2)).reshape(
        ENCODING_DIM, HEADS * OUT_PER_HEAD)

    adj = build_dense_adj(subnetwork, N)

    embeddings = gat_forward(
        encodings, adj, weight, att_src, att_dst, bias, heads=HEADS)
    jax.block_until_ready(embeddings)

    assert embeddings.shape == (N, EMBEDDING_DIM), embeddings.shape
    assert jnp.all(jnp.isfinite(embeddings))
    print("KERNEL_OK")
</pallas_src>

<mosaic_0001>
module attributes {stable_mosaic.version = 11 : i64} {
  func.func @_gat_fused_kernel(%arg0: memref<64x32xf32, #tpu.memory_space<vmem>>, %arg1: memref<32x64xf32, #tpu.memory_space<vmem>>, %arg2: memref<4x16xf32, #tpu.memory_space<vmem>>, %arg3: memref<4x16xf32, #tpu.memory_space<vmem>>, %arg4: memref<64x64xf32, #tpu.memory_space<vmem>>, %arg5: memref<1x64xf32, #tpu.memory_space<vmem>>, %arg6: memref<64x64xf32, #tpu.memory_space<vmem>>) attributes {dimension_semantics = [], scalar_prefetch = 0 : i64, scratch_operands = 0 : i64, tpu.core_type = #tpu.core_type<tc>} {
    %c0 = arith.constant 0 : index
    %c0_0 = arith.constant 0 : index
    %0 = vector.load %arg0[%c0, %c0_0] : memref<64x32xf32, #tpu.memory_space<vmem>>, vector<64x32xf32>
    %c0_1 = arith.constant 0 : index
    %c0_2 = arith.constant 0 : index
    %1 = vector.load %arg1[%c0_1, %c0_2] : memref<32x64xf32, #tpu.memory_space<vmem>>, vector<32x64xf32>
    %cst = arith.constant dense<0.000000e+00> : vector<64x64xf32>
    %2 = tpu.matmul %0, %1, %cst {dimension_numbers = #tpu.dot_dimension_numbers<[1], [0], [0], [1], [0, 0, 1, 1], [], []>} : vector<64x32xf32>, vector<32x64xf32>, vector<64x64xf32> -> vector<64x64xf32>
    %c0_3 = arith.constant 0 : index
    %c0_4 = arith.constant 0 : index
    %3 = vector.load %arg4[%c0_3, %c0_4] : memref<64x64xf32, #tpu.memory_space<vmem>>, vector<64x64xf32>
    %cst_5 = arith.constant 0.000000e+00 : f32
    %4 = vector.broadcast %cst_5 : f32 to vector<64x64xf32>
    %5 = arith.cmpf ogt, %3, %4 : vector<64x64xf32>
    %6 = vector.extract_strided_slice %2 {offsets = [0, 0], sizes = [64, 16], strides = [1, 1]} : vector<64x64xf32> to vector<64x16xf32>
    %c0_6 = arith.constant 0 : index
    %c0_7 = arith.constant 0 : index
    %7 = vector.load %arg2[%c0_6, %c0_7] : memref<4x16xf32, #tpu.memory_space<vmem>>, vector<1x16xf32>
    %8 = vector.broadcast %7 : vector<1x16xf32> to vector<64x16xf32>
    %9 = arith.mulf %6, %8 : vector<64x16xf32>
    %cst_8 = arith.constant dense<0.000000e+00> : vector<64xf32>
    %10 = vector.multi_reduction <add>, %9, %cst_8 [1] : vector<64x16xf32> to vector<64xf32>
    %11 = vector.shape_cast %10 : vector<64xf32> to vector<64x1xf32>
    %c0_9 = arith.constant 0 : index
    %c0_10 = arith.constant 0 : index
    %12 = vector.load %arg3[%c0_9, %c0_10] : memref<4x16xf32, #tpu.memory_space<vmem>>, vector<1x16xf32>
    %13 = vector.broadcast %12 : vector<1x16xf32> to vector<64x16xf32>
    %14 = arith.mulf %6, %13 : vector<64x16xf32>
    %cst_11 = arith.constant dense<0.000000e+00> : vector<64xf32>
    %15 = vector.multi_reduction <add>, %14, %cst_11 [1] : vector<64x16xf32> to vector<64xf32>
    %16 = vector.shape_cast %15 : vector<64xf32> to vector<64x1xf32>
    %17 = tpu.transpose %11, [1, 0] : vector<64x1xf32> -> vector<1x64xf32>
    %18 = vector.broadcast %16 : vector<64x1xf32> to vector<64x64xf32>
    %19 = vector.broadcast %17 : vector<1x64xf32> to vector<64x64xf32>
    %20 = arith.addf %18, %19 : vector<64x64xf32>
    %cst_12 = arith.constant 2.000000e-01 : f32
    %21 = vector.broadcast %cst_12 : f32 to vector<64x64xf32>
    %22 = arith.mulf %21, %20 : vector<64x64xf32>
    %23 = arith.maximumf %20, %22 : vector<64x64xf32>
    %cst_13 = arith.constant -1.000000e+30 : f32
    %24 = vector.broadcast %cst_13 : f32 to vector<64x64xf32>
    %25 = arith.select %5, %23, %24 : vector<64x64xi1>, vector<64x64xf32>
    %cst_14 = arith.constant dense<0xFF800000> : vector<64xf32>
    %26 = vector.multi_reduction <maximumf>, %25, %cst_14 [1] : vector<64x64xf32> to vector<64xf32>
    %27 = vector.shape_cast %26 : vector<64xf32> to vector<64x1xf32>
    %28 = vector.broadcast %27 : vector<64x1xf32> to vector<64x64xf32>
    %29 = arith.subf %25, %28 : vector<64x64xf32>
    %30 = math.exp %29 : vector<64x64xf32>
    %cst_15 = arith.constant dense<0.000000e+00> : vector<64xf32>
    %31 = vector.multi_reduction <add>, %30, %cst_15 [1] : vector<64x64xf32> to vector<64xf32>
    %32 = vector.shape_cast %31 : vector<64xf32> to vector<64x1xf32>
    %33 = tpu.reciprocal %32 {approx = true} : vector<64x1xf32> -> vector<64x1xf32>
    %34 = vector.broadcast %33 : vector<64x1xf32> to vector<64x64xf32>
    %35 = arith.mulf %30, %34 : vector<64x64xf32>
    %cst_16 = arith.constant dense<0.000000e+00> : vector<64x16xf32>
    %36 = tpu.matmul %35, %6, %cst_16 {dimension_numbers = #tpu.dot_dimension_numbers<[1], [0], [0], [1], [0, 0, 1, 1], [], []>} : vector<64x64xf32>, vector<64x16xf32>, vector<64x16xf32> -> vector<64x16xf32>
    %37 = vector.extract_strided_slice %2 {offsets = [0, 16], sizes = [64, 16], strides = [1, 1]} : vector<64x64xf32> to vector<64x16xf32>
    %c1 = arith.constant 1 : index
    %c0_17 = arith.constant 0 : index
    %38 = vector.load %arg2[%c1, %c0_17] : memref<4x16xf32, #tpu.memory_space<vmem>>, vector<1x16xf32>
    %39 = vector.broadcast %38 : vector<1x16xf32> to vector<64x16xf32>
    %40 = arith.mulf %37, %39 : vector<64x16xf32>
    %cst_18 = arith.constant dense<0.000000e+00> : vector<64xf32>
    %41 = vector.multi_reduction <add>, %40, %cst_18 [1] : vector<64x16xf32> to vector<64xf32>
    %42 = vector.shape_cast %41 : vector<64xf32> to vector<64x1xf32>
    %c1_19 = arith.constant 1 : index
    %c0_20 = arith.constant 0 : index
    %43 = vector.load %arg3[%c1_19, %c0_20] : memref<4x16xf32, #tpu.memory_space<vmem>>, vector<1x16xf32>
    %44 = vector.broadcast %43 : vector<1x16xf32> to vector<64x16xf32>
    %45 = arith.mulf %37, %44 : vector<64x16xf32>
    %cst_21 = arith.constant dense<0.000000e+00> : vector<64xf32>
    %46 = vector.multi_reduction <add>, %45, %cst_21 [1] : vector<64x16xf32> to vector<64xf32>
    %47 = vector.shape_cast %46 : vector<64xf32> to vector<64x1xf32>
    %48 = tpu.transpose %42, [1, 0] : vector<64x1xf32> -> vector<1x64xf32>
    %49 = vector.broadcast %47 : vector<64x1xf32> to vector<64x64xf32>
    %50 = vector.broadcast %48 : vector<1x64xf32> to vector<64x64xf32>
    %51 = arith.addf %49, %50 : vector<64x64xf32>
    %cst_22 = arith.constant 2.000000e-01 : f32
    %52 = vector.broadcast %cst_22 : f32 to vector<64x64xf32>
    %53 = arith.mulf %52, %51 : vector<64x64xf32>
    %54 = arith.maximumf %51, %53 : vector<64x64xf32>
    %cst_23 = arith.constant -1.000000e+30 : f32
    %55 = vector.broadcast %cst_23 : f32 to vector<64x64xf32>
    %56 = arith.select %5, %54, %55 : vector<64x64xi1>, vector<64x64xf32>
    %cst_24 = arith.constant dense<0xFF800000> : vector<64xf32>
    %57 = vector.multi_reduction <maximumf>, %56, %cst_24 [1] : vector<64x64xf32> to vector<64xf32>
    %58 = vector.shape_cast %57 : vector<64xf32> to vector<64x1xf32>
    %59 = vector.broadcast %58 : vector<64x1xf32> to vector<64x64xf32>
    %60 = arith.subf %56, %59 : vector<64x64xf32>
    %61 = math.exp %60 : vector<64x64xf32>
    %cst_25 = arith.constant dense<0.000000e+00> : vector<64xf32>
    %62 = vector.multi_reduction <add>, %61, %cst_25 [1] : vector<64x64xf32> to vector<64xf32>
    %63 = vector.shape_cast %62 : vector<64xf32> to vector<64x1xf32>
    %64 = tpu.reciprocal %63 {approx = true} : vector<64x1xf32> -> vector<64x1xf32>
    %65 = vector.broadcast %64 : vector<64x1xf32> to vector<64x64xf32>
    %66 = arith.mulf %61, %65 : vector<64x64xf32>
    %cst_26 = arith.constant dense<0.000000e+00> : vector<64x16xf32>
    %67 = tpu.matmul %66, %37, %cst_26 {dimension_numbers = #tpu.dot_dimension_numbers<[1], [0], [0], [1], [0, 0, 1, 1], [], []>} : vector<64x64xf32>, vector<64x16xf32>, vector<64x16xf32> -> vector<64x16xf32>
    %68 = vector.extract_strided_slice %2 {offsets = [0, 32], sizes = [64, 16], strides = [1, 1]} : vector<64x64xf32> to vector<64x16xf32>
    %c2 = arith.constant 2 : index
    %c0_27 = arith.constant 0 : index
    %69 = vector.load %arg2[%c2, %c0_27] : memref<4x16xf32, #tpu.memory_space<vmem>>, vector<1x16xf32>
    %70 = vector.broadcast %69 : vector<1x16xf32> to vector<64x16xf32>
    %71 = arith.mulf %68, %70 : vector<64x16xf32>
    %cst_28 = arith.constant dense<0.000000e+00> : vector<64xf32>
    %72 = vector.multi_reduction <add>, %71, %cst_28 [1] : vector<64x16xf32> to vector<64xf32>
    %73 = vector.shape_cast %72 : vector<64xf32> to vector<64x1xf32>
    %c2_29 = arith.constant 2 : index
    %c0_30 = arith.constant 0 : index
    %74 = vector.load %arg3[%c2_29, %c0_30] : memref<4x16xf32, #tpu.memory_space<vmem>>, vector<1x16xf32>
    %75 = vector.broadcast %74 : vector<1x16xf32> to vector<64x16xf32>
    %76 = arith.mulf %68, %75 : vector<64x16xf32>
    %cst_31 = arith.constant dense<0.000000e+00> : vector<64xf32>
    %77 = vector.multi_reduction <add>, %76, %cst_31 [1] : vector<64x16xf32> to vector<64xf32>
    %78 = vector.shape_cast %77 : vector<64xf32> to vector<64x1xf32>
    %79 = tpu.transpose %73, [1, 0] : vector<64x1xf32> -> vector<1x64xf32>
    %80 = vector.broadcast %78 : vector<64x1xf32> to vector<64x64xf32>
    %81 = vector.broadcast %79 : vector<1x64xf32> to vector<64x64xf32>
    %82 = arith.addf %80, %81 : vector<64x64xf32>
    %cst_32 = arith.constant 2.000000e-01 : f32
    %83 = vector.broadcast %cst_32 : f32 to vector<64x64xf32>
    %84 = arith.mulf %83, %82 : vector<64x64xf32>
    %85 = arith.maximumf %82, %84 : vector<64x64xf32>
    %cst_33 = arith.constant -1.000000e+30 : f32
    %86 = vector.broadcast %cst_33 : f32 to vector<64x64xf32>
    %87 = arith.select %5, %85, %86 : vector<64x64xi1>, vector<64x64xf32>
    %cst_34 = arith.constant dense<0xFF800000> : vector<64xf32>
    %88 = vector.multi_reduction <maximumf>, %87, %cst_34 [1] : vector<64x64xf32> to vector<64xf32>
    %89 = vector.shape_cast %88 : vector<64xf32> to vector<64x1xf32>
    %90 = vector.broadcast %89 : vector<64x1xf32> to vector<64x64xf32>
    %91 = arith.subf %87, %90 : vector<64x64xf32>
    %92 = math.exp %91 : vector<64x64xf32>
    %cst_35 = arith.constant dense<0.000000e+00> : vector<64xf32>
    %93 = vector.multi_reduction <add>, %92, %cst_35 [1] : vector<64x64xf32> to vector<64xf32>
    %94 = vector.shape_cast %93 : vector<64xf32> to vector<64x1xf32>
    %95 = tpu.reciprocal %94 {approx = true} : vector<64x1xf32> -> vector<64x1xf32>
    %96 = vector.broadcast %95 : vector<64x1xf32> to vector<64x64xf32>
    %97 = arith.mulf %92, %96 : vector<64x64xf32>
    %cst_36 = arith.constant dense<0.000000e+00> : vector<64x16xf32>
    %98 = tpu.matmul %97, %68, %cst_36 {dimension_numbers = #tpu.dot_dimension_numbers<[1], [0], [0], [1], [0, 0, 1, 1], [], []>} : vector<64x64xf32>, vector<64x16xf32>, vector<64x16xf32> -> vector<64x16xf32>
    %99 = vector.extract_strided_slice %2 {offsets = [0, 48], sizes = [64, 16], strides = [1, 1]} : vector<64x64xf32> to vector<64x16xf32>
    %c3 = arith.constant 3 : index
    %c0_37 = arith.constant 0 : index
    %100 = vector.load %arg2[%c3, %c0_37] : memref<4x16xf32, #tpu.memory_space<vmem>>, vector<1x16xf32>
    %101 = vector.broadcast %100 : vector<1x16xf32> to vector<64x16xf32>
    %102 = arith.mulf %99, %101 : vector<64x16xf32>
    %cst_38 = arith.constant dense<0.000000e+00> : vector<64xf32>
    %103 = vector.multi_reduction <add>, %102, %cst_38 [1] : vector<64x16xf32> to vector<64xf32>
    %104 = vector.shape_cast %103 : vector<64xf32> to vector<64x1xf32>
    %c3_39 = arith.constant 3 : index
    %c0_40 = arith.constant 0 : index
    %105 = vector.load %arg3[%c3_39, %c0_40] : memref<4x16xf32, #tpu.memory_space<vmem>>, vector<1x16xf32>
    %106 = vector.broadcast %105 : vector<1x16xf32> to vector<64x16xf32>
    %107 = arith.mulf %99, %106 : vector<64x16xf32>
    %cst_41 = arith.constant dense<0.000000e+00> : vector<64xf32>
    %108 = vector.multi_reduction <add>, %107, %cst_41 [1] : vector<64x16xf32> to vector<64xf32>
    %109 = vector.shape_cast %108 : vector<64xf32> to vector<64x1xf32>
    %110 = tpu.transpose %104, [1, 0] : vector<64x1xf32> -> vector<1x64xf32>
    %111 = vector.broadcast %109 : vector<64x1xf32> to vector<64x64xf32>
    %112 = vector.broadcast %110 : vector<1x64xf32> to vector<64x64xf32>
    %113 = arith.addf %111, %112 : vector<64x64xf32>
    %cst_42 = arith.constant 2.000000e-01 : f32
    %114 = vector.broadcast %cst_42 : f32 to vector<64x64xf32>
    %115 = arith.mulf %114, %113 : vector<64x64xf32>
    %116 = arith.maximumf %113, %115 : vector<64x64xf32>
    %cst_43 = arith.constant -1.000000e+30 : f32
    %117 = vector.broadcast %cst_43 : f32 to vector<64x64xf32>
    %118 = arith.select %5, %116, %117 : vector<64x64xi1>, vector<64x64xf32>
    %cst_44 = arith.constant dense<0xFF800000> : vector<64xf32>
    %119 = vector.multi_reduction <maximumf>, %118, %cst_44 [1] : vector<64x64xf32> to vector<64xf32>
    %120 = vector.shape_cast %119 : vector<64xf32> to vector<64x1xf32>
    %121 = vector.broadcast %120 : vector<64x1xf32> to vector<64x64xf32>
    %122 = arith.subf %118, %121 : vector<64x64xf32>
    %123 = math.exp %122 : vector<64x64xf32>
    %cst_45 = arith.constant dense<0.000000e+00> : vector<64xf32>
    %124 = vector.multi_reduction <add>, %123, %cst_45 [1] : vector<64x64xf32> to vector<64xf32>
    %125 = vector.shape_cast %124 : vector<64xf32> to vector<64x1xf32>
    %126 = tpu.reciprocal %125 {approx = true} : vector<64x1xf32> -> vector<64x1xf32>
    %127 = vector.broadcast %126 : vector<64x1xf32> to vector<64x64xf32>
    %128 = arith.mulf %123, %127 : vector<64x64xf32>
    %cst_46 = arith.constant dense<0.000000e+00> : vector<64x16xf32>
    %129 = tpu.matmul %128, %99, %cst_46 {dimension_numbers = #tpu.dot_dimension_numbers<[1], [0], [0], [1], [0, 0, 1, 1], [], []>} : vector<64x64xf32>, vector<64x16xf32>, vector<64x16xf32> -> vector<64x16xf32>
    %130 = tpu.concatenate %36, %67, %98, %129 in 1 : vector<64x16xf32>, vector<64x16xf32>, vector<64x16xf32>, vector<64x16xf32> -> vector<64x64xf32>
    %c0_47 = arith.constant 0 : index
    %c0_48 = arith.constant 0 : index
    %131 = vector.load %arg5[%c0_47, %c0_48] : memref<1x64xf32, #tpu.memory_space<vmem>>, vector<1x64xf32>
    %132 = vector.broadcast %131 : vector<1x64xf32> to vector<64x64xf32>
    %133 = arith.addf %130, %132 : vector<64x64xf32>
    %c0_49 = arith.constant 0 : index
    %c0_50 = arith.constant 0 : index
    %134 = vector.load %arg6[%c0_49, %c0_50] : memref<64x64xf32, #tpu.memory_space<vmem>>, vector<64x64xf32>
    tpu.vector_store %arg6[%c0_49, %c0_50], %133 {strides = array<i32>} : memref<64x64xf32, #tpu.memory_space<vmem>>, vector<64x64xf32>,
    return
  }
}

</mosaic_0001>

<llo_original>
// kernel: gat_forward.1
$region0: #{gat_forward.1}
  #allocation0 [shape = 'u32[]', space=smem, size = 0x4, offset = 0x4, fixed_abs, tag = 'smem constant byte address 0x4 - core index']
  #allocation1 [shape = 'u32[144,128]{1,0:T(1,128)}', space=vmem, size = 0x12000, scoped, tag = 'internal scratch']
  %s0 = inlined_call_operand.vmem [shape: f32[64,32], index: 0, kind: input, shape index: {}]
  %s1 = inlined_call_operand.vmem [shape: f32[32,64], index: 1, kind: input, shape index: {}]
  %s2 = inlined_call_operand.vmem [shape: f32[4,16], index: 2, kind: input, shape index: {}]
  %s3 = inlined_call_operand.vmem [shape: f32[4,16], index: 3, kind: input, shape index: {}]
  %s4 = inlined_call_operand.vmem [shape: f32[64,64], index: 4, kind: input, shape index: {}]
  %s5 = inlined_call_operand.vmem [shape: f32[1,64], index: 5, kind: input, shape index: {}]
  %s6 = inlined_call_operand.hbm [shape: f32[64,64], index: 6, kind: output, shape index: {}]
  %s7 = sld [smem:[#allocation0]]
  $region34: #{gat_forward.1} parent=0
    _
  %s9 = ssub.s32 1, %s7
  %s10 = scalar_select 0, %s9, %s7
  $region1: #{gat_forward.1} parent=0
    #allocation2 [shape = 'u8[32768]{0}', space=vmem, size = 0x8000, scoped, tag = 'output window, operand 0, single buffered']
    #allocation3 [shape = 's32[1]{0}', space=sflag, size = 0x4, scoped, tag = 'scoped memory for gat_forward.1']
    %11 = vsyncpa [#allocation3], 0
    // Predicated region
    $region2: #{gat_forward.1} parent=1 // pred_check
      _
    $region3: #{gat_forward.1} parent=1 // pred_check_branch
      %13 = sbr.rel (0) target = $region5
    $region4: #{gat_forward.1} parent=1 // pred_region
      _
    $region5: #{gat_forward.1} parent=1 // pred_fallthru
      _
    // Predicated region
    $region6: #{gat_forward.1} parent=1 // pred_check
      _
    $region7: #{gat_forward.1} parent=1 // pred_check_branch
      %15 = sbr.rel (0) target = $region9
    $region8: #{gat_forward.1} parent=1 // pred_region
      _
    $region9: #{gat_forward.1} parent=1 // pred_fallthru
      _
    // Predicated region
    $region10: #{gat_forward.1} parent=1 // pred_check
      _
    $region11: #{gat_forward.1} parent=1 // pred_check_branch
      %17 = sbr.rel (0) target = $region13
    $region12: #{gat_forward.1} parent=1 // pred_region
      _
    $region13: #{gat_forward.1} parent=1 // pred_fallthru
      _
    // Predicated region
    $region14: #{gat_forward.1} parent=1 // pred_check
      _
    $region15: #{gat_forward.1} parent=1 // pred_check_branch
      %19 = sbr.rel (0) target = $region17
    $region16: #{gat_forward.1} parent=1 // pred_region
      _
    $region17: #{gat_forward.1} parent=1 // pred_fallthru
      _
    // Predicated region
    $region18: #{gat_forward.1} parent=1 // pred_check
      _
    $region19: #{gat_forward.1} parent=1 // pred_check_branch
      %21 = sbr.rel (0) target = $region21
    $region20: #{gat_forward.1} parent=1 // pred_region
      _
    $region21: #{gat_forward.1} parent=1 // pred_fallthru
      _
    // Predicated region
    $region22: #{gat_forward.1} parent=1 // pred_check
      _
    $region23: #{gat_forward.1} parent=1 // pred_check_branch
      %23 = sbr.rel (0) target = $region25
    $region24: #{gat_forward.1} parent=1 // pred_region
      _
    $region25: #{gat_forward.1} parent=1 // pred_fallthru
      _
    %v24 = vld [vmem:[%s0] sm:$0xff]
    %v25 = vld [vmem:[%s0 + $0x8] sm:$0xff]
    %v26 = vld [vmem:[%s0 + $0x10] sm:$0xff]
    %v27 = vld [vmem:[%s0 + $0x18] sm:$0xff]
    %v28 = vld [vmem:[%s0 + $0x20] sm:$0xff]
    %v29 = vld [vmem:[%s0 + $0x28] sm:$0xff]
    %v30 = vld [vmem:[%s0 + $0x30] sm:$0xff]
    %v31 = vld [vmem:[%s0 + $0x38] sm:$0xff]
    %v32 = vld [vmem:[%s1] sm:$0xff]
    %v33 = vld [vmem:[%s1 + $0x8] sm:$0xff]
    %v34 = vld [vmem:[%s1 + $0x10] sm:$0xff]
    %v35 = vld [vmem:[%s1 + $0x18] sm:$0xff]
    %vm36 = vcmask 261120
    %v38 = vsel %vm36, %v24, 0
    %v41 = vsel %vm36, %v25, 0
    %v44 = vsel %vm36, %v26, 0
    %v47 = vsel %vm36, %v27, 0
    %v50 = vsel %vm36, %v28, 0
    %v53 = vsel %vm36, %v29, 0
    %v56 = vsel %vm36, %v30, 0
    %v59 = vsel %vm36, %v31, 0
    %61 = vmatprep.subr.mxu0 0.0
    %62 = vmatpush1.msra.mxu0 %v32
    %63 = vmatprep.subr.mxu0 0.0
    %64 = vmatpush1.msra.mxu0 %v33
    %65 = vmatprep.subr.mxu0 0.0
    %66 = vmatpush1.msra.mxu0 %v34
    %67 = vmatprep.subr.mxu0 0.0
    %68 = vmatpush1.msra.mxu0 %v35
    %69 = vmatprep.subr.mxu0 0.0
    %70 = vmatpush1.msra.mxu0 0.0
    %71 = vmatprep.subr.mxu0 0.0
    %72 = vmatpush1.msra.mxu0 0.0
    %73 = vmatprep.subr.mxu0 0.0
    %74 = vmatpush1.msra.mxu0 0.0
    %75 = vmatprep.subr.mxu0 0.0
    %76 = vmatpush1.msra.mxu0 0.0
    %77 = vmatprep.subr.mxu0 0.0
    %78 = vmatpush1.msra.mxu0 0.0
    %79 = vmatprep.subr.mxu0 0.0
    %80 = vmatpush1.msra.mxu0 0.0
    %81 = vmatprep.subr.mxu0 0.0
    %82 = vmatpush1.msra.mxu0 0.0
    %83 = vmatprep.subr.mxu0 0.0
    %84 = vmatpush1.msra.mxu0 0.0
    %85 = vmatprep.subr.mxu0 0.0
    %86 = vmatpush1.msra.mxu0 0.0
    %87 = vmatprep.subr.mxu0 0.0
    %88 = vmatpush1.msra.mxu0 0.0
    %89 = vmatprep.subr.mxu0 0.0
    %90 = vmatpush1.msra.mxu0 0.0
    %91 = vmatprep.subr.mxu0 0.0
    %92 = vmatpush1.msra.mxu0 0.0
    %93 = vmatprep.subr.mxu0 0.0
    %94 = vmatpush1.msra.mxu0 0.0
    %95 = vmatprep.subr.mxu0 0.0
    %96 = vmatpush1.msra.mxu0 0.0
    %97 = vmatprep.subr.mxu0 0.0
    %98 = vmatpush1.msra.mxu0 0.0
    %99 = vmatprep.subr.mxu0 0.0
    %100 = vmatpush1.msra.mxu0 0.0
    %101 = vmatprep.subr.mxu0 0.0
    %102 = vmatpush1.msra.mxu0 0.0
    %103 = vmatprep.subr.mxu0 0.0
    %104 = vmatpush1.msra.mxu0 0.0
    %105 = vmatprep.subr.mxu0 0.0
    %106 = vmatpush1.msra.mxu0 0.0
    %107 = vmatprep.subr.mxu0 0.0
    %108 = vmatpush1.msra.mxu0 0.0
    %109 = vmatprep.subr.mxu0 0.0
    %110 = vmatpush1.msra.mxu0 0.0
    %111 = vmatprep.subr.mxu0 0.0
    %112 = vmatpush1.msra.mxu0 0.0
    %113 = vmatprep.subr.mxu0 0.0
    %114 = vmatpush1.msra.mxu0 0.0
    %115 = vmatprep.subr.mxu0 0.0
    %116 = vmatpush1.msra.mxu0 0.0
    %117 = vmatprep.subr.mxu0 0.0
    %118 = vmatpush1.msra.mxu0 0.0
    %119 = vmatprep.subr.mxu0 0.0
    %120 = vmatpush1.msra.mxu0 0.0
    %121 = vmatprep.subr.mxu0 0.0
    %122 = vmatpush1.msra.mxu0 0.0
    %123 = vmatprep.subr.mxu0 0.0
    %124 = vmatpush1.msra.mxu0 0.0
    %125 = vmatprep.mubr.f32.mxu0 0.0
    %126 = vmatmul.mubr.f32.gmra.mrb[0].mxu0 %v38
    %v127 = vpop.f32.mrb[0].mxu0
    %v128 = vadd.f32 0.0, %v127
    %v129 = vpop.f32.mrb[0].mxu0
    %130 = vmatprep.mubr.f32.mxu0 0.0
    %131 = vmatmul.mubr.f32.gmra.mrb[0].mxu0 %v41
    %v132 = vpop.f32.mrb[0].mxu0
    %v133 = vadd.f32 0.0, %v132
    %v134 = vpop.f32.mrb[0].mxu0
    %135 = vmatprep.mubr.f32.mxu0 0.0
    %136 = vmatmul.mubr.f32.gmra.mrb[0].mxu0 %v44
    %v137 = vpop.f32.mrb[0].mxu0
    %v138 = vadd.f32 0.0, %v137
    %v139 = vpop.f32.mrb[0].mxu0
    %140 = vmatprep.mubr.f32.mxu0 0.0
    %141 = vmatmul.mubr.f32.gmra.mrb[0].mxu0 %v47
    %v142 = vpop.f32.mrb[0].mxu0
    %v143 = vadd.f32 0.0, %v142
    %v144 = vpop.f32.mrb[0].mxu0
    %145 = vmatprep.mubr.f32.mxu0 0.0
    %146 = vmatmul.mubr.f32.gmra.mrb[0].mxu0 %v50
    %v147 = vpop.f32.mrb[0].mxu0
    %v148 = vadd.f32 0.0, %v147
    %v149 = vpop.f32.mrb[0].mxu0
    %150 = vmatprep.mubr.f32.mxu0 0.0
    %151 = vmatmul.mubr.f32.gmra.mrb[0].mxu0 %v53
    %v152 = vpop.f32.mrb[0].mxu0
    %v153 = vadd.f32 0.0, %v152
    %v154 = vpop.f32.mrb[0].mxu0
    %155 = vmatprep.mubr.f32.mxu0 0.0
    %156 = vmatmul.mubr.f32.gmra.mrb[0].mxu0 %v56
    %v157 = vpop.f32.mrb[0].mxu0
    %v158 = vadd.f32 0.0, %v157
    %v159 = vpop.f32.mrb[0].mxu0
    %160 = vmatprep.mubr.f32.mxu0 0.0
    %161 = vmatmul.mubr.f32.gmra.mrb[0].mxu0 %v59
    %v162 = vpop.f32.mrb[0].mxu0
    %v163 = vadd.f32 0.0, %v162
    %v164 = vpop.f32.mrb[0].mxu0
    %165 = vdwg.mxu0
    %v166 = vld [vmem:[%s4] sm:$0xff]
    %v167 = vld [vmem:[%s4 + $0x8] sm:$0xff]
    %v168 = vld [vmem:[%s4 + $0x10] sm:$0xff]
    %v169 = vld [vmem:[%s4 + $0x18] sm:$0xff]
    %v170 = vld [vmem:[%s4 + $0x20] sm:$0xff]
    %v171 = vld [vmem:[%s4 + $0x28] sm:$0xff]
    %v172 = vld [vmem:[%s4 + $0x30] sm:$0xff]
    %v173 = vld [vmem:[%s4 + $0x38] sm:$0xff]
    %vm174 = vcmp.gt.f32.partialorder %v166, 0.0
    %vm175 = vcmp.gt.f32.partialorder %v167, 0.0
    %vm176 = vcmp.gt.f32.partialorder %v168, 0.0
    %vm177 = vcmp.gt.f32.partialorder %v169, 0.0
    %vm178 = vcmp.gt.f32.partialorder %v170, 0.0
    %vm179 = vcmp.gt.f32.partialorder %v171, 0.0
    %vm180 = vcmp.gt.f32.partialorder %v172, 0.0
    %vm181 = vcmp.gt.f32.partialorder %v173, 0.0
    %v182 = vld [vmem:[%s2] sm:$0x1]
    %v183 = vlaneseq
    %v184 = vshrl.u32 %v183, 7
    %v185 = vsub.s32 0, %v184
    %v186 = vrot.slane %v182, %v185
    %v187 = vmul.f32 %v128, %v186
    %v188 = vmul.f32 %v133, %v186
    %v189 = vmul.f32 %v138, %v186
    %v190 = vmul.f32 %v143, %v186
    %v191 = vmul.f32 %v148, %v186
    %v192 = vmul.f32 %v153, %v186
    %v193 = vmul.f32 %v158, %v186
    %v194 = vmul.f32 %v163, %v186
    %vm195 = vcmask 130048
    %v196 = vsel %vm195, %v187, 0.0
    %197 = vadd.xlane.f32.xlu0 %v196
    %v198 = vpop.xlane.xlu0 %197
    %v199 = vsel %vm195, %v188, 0.0
    %200 = vadd.xlane.f32.xlu0 %v199
    %v201 = vpop.xlane.xlu0 %200
    %v202 = vsel %vm195, %v189, 0.0
    %203 = vadd.xlane.f32.xlu0 %v202
    %v204 = vpop.xlane.xlu0 %203
    %v205 = vsel %vm195, %v190, 0.0
    %206 = vadd.xlane.f32.xlu0 %v205
    %v207 = vpop.xlane.xlu0 %206
    %v208 = vsel %vm195, %v191, 0.0
    %209 = vadd.xlane.f32.xlu0 %v208
    %v210 = vpop.xlane.xlu0 %209
    %v211 = vsel %vm195, %v192, 0.0
    %212 = vadd.xlane.f32.xlu0 %v211
    %v213 = vpop.xlane.xlu0 %212
    %v214 = vsel %vm195, %v193, 0.0
    %215 = vadd.xlane.f32.xlu0 %v214
    %v216 = vpop.xlane.xlu0 %215
    %v217 = vsel %vm195, %v194, 0.0
    %218 = vadd.xlane.f32.xlu0 %v217
    %v219 = vpop.xlane.xlu0 %218
    %v220 = vld [vmem:[%s3] sm:$0x1]
    %v221 = vlaneseq
    %v222 = vshrl.u32 %v221, 7
    %v223 = vsub.s32 0, %v222
    %v224 = vrot.slane %v220, %v223
    %v225 = vmul.f32 %v128, %v224
    %v226 = vmul.f32 %v133, %v224
    %v227 = vmul.f32 %v138, %v224
    %v228 = vmul.f32 %v143, %v224
    %v229 = vmul.f32 %v148, %v224
    %v230 = vmul.f32 %v153, %v224
    %v231 = vmul.f32 %v158, %v224
    %v232 = vmul.f32 %v163, %v224
    %v233 = vsel %vm195, %v225, 0.0
    %234 = vadd.xlane.f32.xlu0 %v233
    %v235 = vpop.xlane.xlu0 %234
    %v236 = vsel %vm195, %v226, 0.0
    %237 = vadd.xlane.f32.xlu0 %v236
    %v238 = vpop.xlane.xlu0 %237
    %v239 = vsel %vm195, %v227, 0.0
    %240 = vadd.xlane.f32.xlu0 %v239
    %v241 = vpop.xlane.xlu0 %240
    %v242 = vsel %vm195, %v228, 0.0
    %243 = vadd.xlane.f32.xlu0 %v242
    %v244 = vpop.xlane.xlu0 %243
    %v245 = vsel %vm195, %v229, 0.0
    %246 = vadd.xlane.f32.xlu0 %v245
    %v247 = vpop.xlane.xlu0 %246
    %v248 = vsel %vm195, %v230, 0.0
    %249 = vadd.xlane.f32.xlu0 %v248
    %v250 = vpop.xlane.xlu0 %249
    %v251 = vsel %vm195, %v231, 0.0
    %252 = vadd.xlane.f32.xlu0 %v251
    %v253 = vpop.xlane.xlu0 %252
    %v254 = vsel %vm195, %v232, 0.0
    %255 = vadd.xlane.f32.xlu0 %v254
    %v256 = vpop.xlane.xlu0 %255
    %257 = vxpose.xlu0.b32.start [1/16] %v198, 128
    %258 = vxpose.xlu0.b32.cont [2/16] %v201, 128
    %259 = vxpose.xlu0.b32.cont [3/16] %v204, 128
    %260 = vxpose.xlu0.b32.cont [4/16] %v207, 128
    %261 = vxpose.xlu0.b32.cont [5/16] %v210, 128
    %262 = vxpose.xlu0.b32.cont [6/16] %v213, 128
    %263 = vxpose.xlu0.b32.cont [7/16] %v216, 128
    %264 = vxpose.xlu0.b32.cont [8/16] %v219, 128
    %265 = vxpose.xlu0.b32.cont [9/16] 0.0, 128
    %266 = vxpose.xlu0.b32.cont [10/16] 0.0, 128
    %267 = vxpose.xlu0.b32.cont [11/16] 0.0, 128
    %268 = vxpose.xlu0.b32.cont [12/16] 0.0, 128
    %269 = vxpose.xlu0.b32.cont [13/16] 0.0, 128
    %270 = vxpose.xlu0.b32.cont [14/16] 0.0, 128
    %271 = vxpose.xlu0.b32.cont [15/16] 0.0, 128
    %272 = vxpose.xlu0.b32.end [16/16] 0.0, 128
    %v273 = vpop.trf.xlu0
    %v274 = vpop.trf.xlu0
    %v275 = vpop.trf.xlu0
    %v276 = vpop.trf.xlu0
    %v277 = vpop.trf.xlu0
    %v278 = vpop.trf.xlu0
    %v279 = vpop.trf.xlu0
    %v280 = vpop.trf.xlu0
    %v281 = vpop.trf.xlu0
    %v282 = vpop.trf.xlu0
    %v283 = vpop.trf.xlu0
    %v284 = vpop.trf.xlu0
    %v285 = vpop.trf.xlu0
    %v286 = vpop.trf.xlu0
    %v287 = vpop.trf.xlu0
    %v288 = vpop.trf.xlu0
    %v289 = vlaneseq
    %v290 = vshrl.u32 %v289, 7
    %v291 = vsub.s32 0, %v290
    %v292 = vrot.slane %v273, %v291
    %v293 = vadd.f32 %v235, %v292
    %v294 = vadd.f32 %v238, %v292
    %v295 = vadd.f32 %v241, %v292
    %v296 = vadd.f32 %v244, %v292
    %v297 = vadd.f32 %v247, %v292
    %v298 = vadd.f32 %v250, %v292
    %v299 = vadd.f32 %v253, %v292
    %v300 = vadd.f32 %v256, %v292
    %v301 = vmul.f32 %v293, 0.2
    %v302 = vmul.f32 %v294, 0.2
    %v303 = vmul.f32 %v295, 0.2
    %v304 = vmul.f32 %v296, 0.2
    %v305 = vmul.f32 %v297, 0.2
    %v306 = vmul.f32 %v298, 0.2
    %v307 = vmul.f32 %v299, 0.2
    %v308 = vmul.f32 %v300, 0.2
    %v309 = vmax.f32 %v293, %v301
    %v310 = vmax.f32 %v294, %v302
    %v311 = vmax.f32 %v295, %v303
    %v312 = vmax.f32 %v296, %v304
    %v313 = vmax.f32 %v297, %v305
    %v314 = vmax.f32 %v298, %v306
    %v315 = vmax.f32 %v299, %v307
    %v316 = vmax.f32 %v300, %v308
    %v317 = vsel %vm174, %v309, -1e+30
    %v318 = vsel %vm175, %v310, -1e+30
    %v319 = vsel %vm176, %v311, -1e+30
    %v320 = vsel %vm177, %v312, -1e+30
    %v321 = vsel %vm178, %v313, -1e+30
    %v322 = vsel %vm179, %v314, -1e+30
    %v323 = vsel %vm180, %v315, -1e+30
    %v324 = vsel %vm181, %v316, -1e+30
    %vm325 = vcmask 523264
    %v326 = vsel %vm325, %v317, -inf
    %327 = vmax.xlane.f32.xlu0 %v326
    %v328 = vpop.xlane.xlu0 %327
    %v329 = vsel %vm325, %v318, -inf
    %330 = vmax.xlane.f32.xlu0 %v329
    %v331 = vpop.xlane.xlu0 %330
    %v332 = vsel %vm325, %v319, -inf
    %333 = vmax.xlane.f32.xlu0 %v332
    %v334 = vpop.xlane.xlu0 %333
    %v335 = vsel %vm325, %v320, -inf
    %336 = vmax.xlane.f32.xlu0 %v335
    %v337 = vpop.xlane.xlu0 %336
    %v338 = vsel %vm325, %v321, -inf
    %339 = vmax.xlane.f32.xlu0 %v338
    %v340 = vpop.xlane.xlu0 %339
    %v341 = vsel %vm325, %v322, -inf
    %342 = vmax.xlane.f32.xlu0 %v341
    %v343 = vpop.xlane.xlu0 %342
    %v344 = vsel %vm325, %v323, -inf
    %345 = vmax.xlane.f32.xlu0 %v344
    %v346 = vpop.xlane.xlu0 %345
    %v347 = vsel %vm325, %v324, -inf
    %348 = vmax.xlane.f32.xlu0 %v347
    %v349 = vpop.xlane.xlu0 %348
    %v350 = vsub.f32 %v317, %v328
    %v351 = vsub.f32 %v318, %v331
    %v352 = vsub.f32 %v319, %v334
    %v353 = vsub.f32 %v320, %v337
    %v354 = vsub.f32 %v321, %v340
    %v355 = vsub.f32 %v322, %v343
    %v356 = vsub.f32 %v323, %v346
    %v357 = vsub.f32 %v324, %v349
    %v358 = vmul.f32 %v350, 1.442695
    %v359 = vpow.pop %v358
    %v360 = vmul.f32 %v351, 1.442695
    %v361 = vpow.pop %v360
    %v362 = vmul.f32 %v352, 1.442695
    %v363 = vpow.pop %v362
    %v364 = vmul.f32 %v353, 1.442695
    %v365 = vpow.pop %v364
    %v366 = vmul.f32 %v354, 1.442695
    %v367 = vpow.pop %v366
    %v368 = vmul.f32 %v355, 1.442695
    %v369 = vpow.pop %v368
    %v370 = vmul.f32 %v356, 1.442695
    %v371 = vpow.pop %v370
    %v372 = vmul.f32 %v357, 1.442695
    %v373 = vpow.pop %v372
    %v374 = vsel %vm325, %v359, 0.0
    %375 = vadd.xlane.f32.xlu0 %v374
    %v376 = vpop.xlane.xlu0 %375
    %v377 = vsel %vm325, %v361, 0.0
    %378 = vadd.xlane.f32.xlu0 %v377
    %v379 = vpop.xlane.xlu0 %378
    %v380 = vsel %vm325, %v363, 0.0
    %381 = vadd.xlane.f32.xlu0 %v380
    %v382 = vpop.xlane.xlu0 %381
    %v383 = vsel %vm325, %v365, 0.0
    %384 = vadd.xlane.f32.xlu0 %v383
    %v385 = vpop.xlane.xlu0 %384
    %v386 = vsel %vm325, %v367, 0.0
    %387 = vadd.xlane.f32.xlu0 %v386
    %v388 = vpop.xlane.xlu0 %387
    %v389 = vsel %vm325, %v369, 0.0
    %390 = vadd.xlane.f32.xlu0 %v389
    %v391 = vpop.xlane.xlu0 %390
    %v392 = vsel %vm325, %v371, 0.0
    %393 = vadd.xlane.f32.xlu0 %v392
    %v394 = vpop.xlane.xlu0 %393
    %v395 = vsel %vm325, %v373, 0.0
    %396 = vadd.xlane.f32.xlu0 %v395
    %v397 = vpop.xlane.xlu0 %396
    %v398 = vrcp.pop %v376
    %v399 = vrcp.pop %v379
    %v400 = vrcp.pop %v382
    %v401 = vrcp.pop %v385
    %v402 = vrcp.pop %v388
    %v403 = vrcp.pop %v391
    %v404 = vrcp.pop %v394
    %v405 = vrcp.pop %v397
    %v406 = vmul.f32 %v359, %v398
    %v407 = vmul.f32 %v361, %v399
    %v408 = vmul.f32 %v363, %v400
    %v409 = vmul.f32 %v365, %v401
    %v410 = vmul.f32 %v367, %v402
    %v411 = vmul.f32 %v369, %v403
    %v412 = vmul.f32 %v371, %v404
    %v413 = vmul.f32 %v373, %v405
    %v415 = vsel %vm325, %v406, 0
    %v418 = vsel %vm325, %v407, 0
    %v421 = vsel %vm325, %v408, 0
    %v424 = vsel %vm325, %v409, 0
    %v427 = vsel %vm325, %v410, 0
    %v430 = vsel %vm325, %v411, 0
    %v433 = vsel %vm325, %v412, 0
    %v436 = vsel %vm325, %v413, 0
    %438 = vmatprep.subr.mxu0 0.0
    %439 = vmatpush1.msra.mxu0 %v128
    %440 = vmatprep.subr.mxu0 0.0
    %441 = vmatpush1.msra.mxu0 %v133
    %442 = vmatprep.subr.mxu0 0.0
    %443 = vmatpush1.msra.mxu0 %v138
    %444 = vmatprep.subr.mxu0 0.0
    %445 = vmatpush1.msra.mxu0 %v143
    %446 = vmatprep.subr.mxu0 0.0
    %447 = vmatpush1.msra.mxu0 %v148
    %448 = vmatprep.subr.mxu0 0.0
    %449 = vmatpush1.msra.mxu0 %v153
    %450 = vmatprep.subr.mxu0 0.0
    %451 = vmatpush1.msra.mxu0 %v158
    %452 = vmatprep.subr.mxu0 0.0
    %453 = vmatpush1.msra.mxu0 %v163
    %454 = vmatprep.subr.mxu0 0.0
    %455 = vmatpush1.msra.mxu0 0.0
    %456 = vmatprep.subr.mxu0 0.0
    %457 = vmatpush1.msra.mxu0 0.0
    %458 = vmatprep.subr.mxu0 0.0
    %459 = vmatpush1.msra.mxu0 0.0
    %460 = vmatprep.subr.mxu0 0.0
    %461 = vmatpush1.msra.mxu0 0.0
    %462 = vmatprep.subr.mxu0 0.0
    %463 = vmatpush1.msra.mxu0 0.0
    %464 = vmatprep.subr.mxu0 0.0
    %465 = vmatpush1.msra.mxu0 0.0
    %466 = vmatprep.subr.mxu0 0.0
    %467 = vmatpush1.msra.mxu0 0.0
    %468 = vmatprep.subr.mxu0 0.0
    %469 = vmatpush1.msra.mxu0 0.0
    %470 = vmatprep.subr.mxu0 0.0
    %471 = vmatpush1.msra.mxu0 0.0
    %472 = vmatprep.subr.mxu0 0.0
    %473 = vmatpush1.msra.mxu0 0.0
    %474 = vmatprep.subr.mxu0 0.0
    %475 = vmatpush1.msra.mxu0 0.0
    %476 = vmatprep.subr.mxu0 0.0
    %477 = vmatpush1.msra.mxu0 0.0
    %478 = vmatprep.subr.mxu0 0.0
    %479 = vmatpush1.msra.mxu0 0.0
    %480 = vmatprep.subr.mxu0 0.0
    %481 = vmatpush1.msra.mxu0 0.0
    %482 = vmatprep.subr.mxu0 0.0
    %483 = vmatpush1.msra.mxu0 0.0
    %484 = vmatprep.subr.mxu0 0.0
    %485 = vmatpush1.msra.mxu0 0.0
    %486 = vmatprep.subr.mxu0 0.0
    %487 = vmatpush1.msra.mxu0 0.0
    %488 = vmatprep.subr.mxu0 0.0
    %489 = vmatpush1.msra.mxu0 0.0
    %490 = vmatprep.subr.mxu0 0.0
    %491 = vmatpush1.msra.mxu0 0.0
    %492 = vmatprep.subr.mxu0 0.0
    %493 = vmatpush1.msra.mxu0 0.0
    %494 = vmatprep.subr.mxu0 0.0
    %495 = vmatpush1.msra.mxu0 0.0
    %496 = vmatprep.subr.mxu0 0.0
    %497 = vmatpush1.msra.mxu0 0.0
    %498 = vmatprep.subr.mxu0 0.0
    %499 = vmatpush1.msra.mxu0 0.0
    %500 = vmatprep.subr.mxu0 0.0
    %501 = vmatpush1.msra.mxu0 0.0
    %502 = vmatprep.mubr.f32.mxu0 0.0
    %503 = vmatmul.mubr.f32.gmra.mrb[0].mxu0 %v415
    %v504 = vpop.f32.mrb[0].mxu0
    %v505 = vadd.f32 0.0, %v504
    %v506 = vpop.f32.mrb[0].mxu0
    %507 = vmatprep.mubr.f32.mxu0 0.0
    %508 = vmatmul.mubr.f32.gmra.mrb[0].mxu0 %v418
    %v509 = vpop.f32.mrb[0].mxu0
    %v510 = vadd.f32 0.0, %v509
    %v511 = vpop.f32.mrb[0].mxu0
    %512 = vmatprep.mubr.f32.mxu0 0.0
    %513 = vmatmul.mubr.f32.gmra.mrb[0].mxu0 %v421
    %v514 = vpop.f32.mrb[0].mxu0
    %v515 = vadd.f32 0.0, %v514
    %v516 = vpop.f32.mrb[0].mxu0
    %517 = vmatprep.mubr.f32.mxu0 0.0
    %518 = vmatmul.mubr.f32.gmra.mrb[0].mxu0 %v424
    %v519 = vpop.f32.mrb[0].mxu0
    %v520 = vadd.f32 0.0, %v519
    %v521 = vpop.f32.mrb[0].mxu0
    %522 = vmatprep.mubr.f32.mxu0 0.0
    %523 = vmatmul.mubr.f32.gmra.mrb[0].mxu0 %v427
    %v524 = vpop.f32.mrb[0].mxu0
    %v525 = vadd.f32 0.0, %v524
    %v526 = vpop.f32.mrb[0].mxu0
    %527 = vmatprep.mubr.f32.mxu0 0.0
    %528 = vmatmul.mubr.f32.gmra.mrb[0].mxu0 %v430
    %v529 = vpop.f32.mrb[0].mxu0
    %v530 = vadd.f32 0.0, %v529
    %v531 = vpop.f32.mrb[0].mxu0
    %532 = vmatprep.mubr.f32.mxu0 0.0
    %533 = vmatmul.mubr.f32.gmra.mrb[0].mxu0 %v433
    %v534 = vpop.f32.mrb[0].mxu0
    %v535 = vadd.f32 0.0, %v534
    %v536 = vpop.f32.mrb[0].mxu0
    %537 = vmatprep.mubr.f32.mxu0 0.0
    %538 = vmatmul.mubr.f32.gmra.mrb[0].mxu0 %v436
    %v539 = vpop.f32.mrb[0].mxu0
    %v540 = vadd.f32 0.0, %v539
    %v541 = vpop.f32.mrb[0].mxu0
    %542 = vdwg.mxu0
    %v543 = vld [vmem:[%s2 + $0x1] sm:$0x1]
    %v544 = vlaneseq
    %v545 = vshrl.u32 %v544, 7
    %v546 = vsub.s32 0, %v545
    %v547 = vrot.slane %v543, %v546
    %549 = vrot.lane.b32.xlu0 %v547, 16
    %v550 = vpop.permute.xlu0 %549
    %v552 = vmul.f32 %v128, %v550
    %v553 = vmul.f32 %v133, %v550
    %v554 = vmul.f32 %v138, %v550
    %v555 = vmul.f32 %v143, %v550
    %v556 = vmul.f32 %v148, %v550
    %v557 = vmul.f32 %v153, %v550
    %v558 = vmul.f32 %v158, %v550
    %v559 = vmul.f32 %v163, %v550
    %568 = vrot.lane.b32.xlu0 %v552, 112
    %v569 = vpop.permute.xlu0 %568
    %570 = vrot.lane.b32.xlu0 %v553, 112
    %v571 = vpop.permute.xlu0 %570
    %572 = vrot.lane.b32.xlu0 %v554, 112
    %v573 = vpop.permute.xlu0 %572
    %574 = vrot.lane.b32.xlu0 %v555, 112
    %v575 = vpop.permute.xlu0 %574
    %576 = vrot.lane.b32.xlu0 %v556, 112
    %v577 = vpop.permute.xlu0 %576
    %578 = vrot.lane.b32.xlu0 %v557, 112
    %v579 = vpop.permute.xlu0 %578
    %580 = vrot.lane.b32.xlu0 %v558, 112
    %v581 = vpop.permute.xlu0 %580
    %582 = vrot.lane.b32.xlu0 %v559, 112
    %v583 = vpop.permute.xlu0 %582
    %v592 = vsel %vm195, %v569, 0.0
    %593 = vadd.xlane.f32.xlu0 %v592
    %v594 = vpop.xlane.xlu0 %593
    %v595 = vsel %vm195, %v571, 0.0
    %596 = vadd.xlane.f32.xlu0 %v595
    %v597 = vpop.xlane.xlu0 %596
    %v598 = vsel %vm195, %v573, 0.0
    %599 = vadd.xlane.f32.xlu0 %v598
    %v600 = vpop.xlane.xlu0 %599
    %v601 = vsel %vm195, %v575, 0.0
    %602 = vadd.xlane.f32.xlu0 %v601
    %v603 = vpop.xlane.xlu0 %602
    %v604 = vsel %vm195, %v577, 0.0
    %605 = vadd.xlane.f32.xlu0 %v604
    %v606 = vpop.xlane.xlu0 %605
    %v607 = vsel %vm195, %v579, 0.0
    %608 = vadd.xlane.f32.xlu0 %v607
    %v609 = vpop.xlane.xlu0 %608
    %v610 = vsel %vm195, %v581, 0.0
    %611 = vadd.xlane.f32.xlu0 %v610
    %v612 = vpop.xlane.xlu0 %611
    %v613 = vsel %vm195, %v583, 0.0
    %614 = vadd.xlane.f32.xlu0 %v613
    %v615 = vpop.xlane.xlu0 %614
    %v616 = vld [vmem:[%s3 + $0x1] sm:$0x1]
    %v617 = vlaneseq
    %v618 = vshrl.u32 %v617, 7
    %v619 = vsub.s32 0, %v618
    %v620 = vrot.slane %v616, %v619
    %622 = vrot.lane.b32.xlu0 %v620, 16
    %v623 = vpop.permute.xlu0 %622
    %v625 = vmul.f32 %v128, %v623
    %v626 = vmul.f32 %v133, %v623
    %v627 = vmul.f32 %v138, %v623
    %v628 = vmul.f32 %v143, %v623
    %v629 = vmul.f32 %v148, %v623
    %v630 = vmul.f32 %v153, %v623
    %v631 = vmul.f32 %v158, %v623
    %v632 = vmul.f32 %v163, %v623
    %641 = vrot.lane.b32.xlu0 %v625, 112
    %v642 = vpop.permute.xlu0 %641
    %643 = vrot.lane.b32.xlu0 %v626, 112
    %v644 = vpop.permute.xlu0 %643
    %645 = vrot.lane.b32.xlu0 %v627, 112
    %v646 = vpop.permute.xlu0 %645
    %647 = vrot.lane.b32.xlu0 %v628, 112
    %v648 = vpop.permute.xlu0 %647
    %649 = vrot.lane.b32.xlu0 %v629, 112
    %v650 = vpop.permute.xlu0 %649
    %651 = vrot.lane.b32.xlu0 %v630, 112
    %v652 = vpop.permute.xlu0 %651
    %653 = vrot.lane.b32.xlu0 %v631, 112
    %v654 = vpop.permute.xlu0 %653
    %655 = vrot.lane.b32.xlu0 %v632, 112
    %v656 = vpop.permute.xlu0 %655
    %v665 = vsel %vm195, %v642, 0.0
    %666 = vadd.xlane.f32.xlu0 %v665
    %v667 = vpop.xlane.xlu0 %666
    %v668 = vsel %vm195, %v644, 0.0
    %669 = vadd.xlane.f32.xlu0 %v668
    %v670 = vpop.xlane.xlu0 %669
    %v671 = vsel %vm195, %v646, 0.0
    %672 = vadd.xlane.f32.xlu0 %v671
    %v673 = vpop.xlane.xlu0 %672
    %v674 = vsel %vm195, %v648, 0.0
    %675 = vadd.xlane.f32.xlu0 %v674
    %v676 = vpop.xlane.xlu0 %675
    %v677 = vsel %vm195, %v650, 0.0
    %678 = vadd.xlane.f32.xlu0 %v677
    %v679 = vpop.xlane.xlu0 %678
    %v680 = vsel %vm195, %v652, 0.0
    %681 = vadd.xlane.f32.xlu0 %v680
    %v682 = vpop.xlane.xlu0 %681
    %v683 = vsel %vm195, %v654, 0.0
    %684 = vadd.xlane.f32.xlu0 %v683
    %v685 = vpop.xlane.xlu0 %684
    %v686 = vsel %vm195, %v656, 0.0
    %687 = vadd.xlane.f32.xlu0 %v686
    %v688 = vpop.xlane.xlu0 %687
    %689 = vxpose.xlu0.b32.start [1/16] %v594, 128
    %690 = vxpose.xlu0.b32.cont [2/16] %v597, 128
    %691 = vxpose.xlu0.b32.cont [3/16] %v600, 128
    %692 = vxpose.xlu0.b32.cont [4/16] %v603, 128
    %693 = vxpose.xlu0.b32.cont [5/16] %v606, 128
    %694 = vxpose.xlu0.b32.cont [6/16] %v609, 128
    %695 = vxpose.xlu0.b32.cont [7/16] %v612, 128
    %696 = vxpose.xlu0.b32.cont [8/16] %v615, 128
    %697 = vxpose.xlu0.b32.cont [9/16] 0.0, 128
    %698 = vxpose.xlu0.b32.cont [10/16] 0.0, 128
    %699 = vxpose.xlu0.b32.cont [11/16] 0.0, 128
    %700 = vxpose.xlu0.b32.cont [12/16] 0.0, 128
    %701 = vxpose.xlu0.b32.cont [13/16] 0.0, 128
    %702 = vxpose.xlu0.b32.cont [14/16] 0.0, 128
    %703 = vxpose.xlu0.b32.cont [15/16] 0.0, 128
    %704 = vxpose.xlu0.b32.end [16/16] 0.0, 128
    %v705 = vpop.trf.xlu0
    %v706 = vpop.trf.xlu0
    %v707 = vpop.trf.xlu0
    %v708 = vpop.trf.xlu0
    %v709 = vpop.trf.xlu0
    %v710 = vpop.trf.xlu0
    %v711 = vpop.trf.xlu0
    %v712 = vpop.trf.xlu0
    %v713 = vpop.trf.xlu0
    %v714 = vpop.trf.xlu0
    %v715 = vpop.trf.xlu0
    %v716 = vpop.trf.xlu0
    %v717 = vpop.trf.xlu0
    %v718 = vpop.trf.xlu0
    %v719 = vpop.trf.xlu0
    %v720 = vpop.trf.xlu0
    %v721 = vlaneseq
    %v722 = vshrl.u32 %v721, 7
    %v723 = vsub.s32 0, %v722
    %v724 = vrot.slane %v705, %v723
    %v725 = vadd.f32 %v667, %v724
    %v726 = vadd.f32 %v670, %v724
    %v727 = vadd.f32 %v673, %v724
    %v728 = vadd.f32 %v676, %v724
    %v729 = vadd.f32 %v679, %v724
    %v730 = vadd.f32 %v682, %v724
    %v731 = vadd.f32 %v685, %v724
    %v732 = vadd.f32 %v688, %v724
    %v733 = vmul.f32 %v725, 0.2
    %v734 = vmul.f32 %v726, 0.2
    %v735 = vmul.f32 %v727, 0.2
    %v736 = vmul.f32 %v728, 0.2
    %v737 = vmul.f32 %v729, 0.2
    %v738 = vmul.f32 %v730, 0.2
    %v739 = vmul.f32 %v731, 0.2
    %v740 = vmul.f32 %v732, 0.2
    %v741 = vmax.f32 %v725, %v733
    %v742 = vmax.f32 %v726, %v734
    %v743 = vmax.f32 %v727, %v735
    %v744 = vmax.f32 %v728, %v736
    %v745 = vmax.f32 %v729, %v737
    %v746 = vmax.f32 %v730, %v738
    %v747 = vmax.f32 %v731, %v739
    %v748 = vmax.f32 %v732, %v740
    %v749 = vsel %vm174, %v741, -1e+30
    %v750 = vsel %vm175, %v742, -1e+30
    %v751 = vsel %vm176, %v743, -1e+30
    %v752 = vsel %vm177, %v744, -1e+30
    %v753 = vsel %vm178, %v745, -1e+30
    %v754 = vsel %vm179, %v746, -1e+30
    %v755 = vsel %vm180, %v747, -1e+30
    %v756 = vsel %vm181, %v748, -1e+30
    %v757 = vsel %vm325, %v749, -inf
    %758 = vmax.xlane.f32.xlu0 %v757
    %v759 = vpop.xlane.xlu0 %758
    %v760 = vsel %vm325, %v750, -inf
    %761 = vmax.xlane.f32.xlu0 %v760
    %v762 = vpop.xlane.xlu0 %761
    %v763 = vsel %vm325, %v751, -inf
    %764 = vmax.xlane.f32.xlu0 %v763
    %v765 = vpop.xlane.xlu0 %764
    %v766 = vsel %vm325, %v752, -inf
    %767 = vmax.xlane.f32.xlu0 %v766
    %v768 = vpop.xlane.xlu0 %767
    %v769 = vsel %vm325, %v753, -inf
    %770 = vmax.xlane.f32.xlu0 %v769
    %v771 = vpop.xlane.xlu0 %770
    %v772 = vsel %vm325, %v754, -inf
    %773 = vmax.xlane.f32.xlu0 %v772
    %v774 = vpop.xlane.xlu0 %773
    %v775 = vsel %vm325, %v755, -inf
    %776 = vmax.xlane.f32.xlu0 %v775
    %v777 = vpop.xlane.xlu0 %776
    %v778 = vsel %vm325, %v756, -inf
    %779 = vmax.xlane.f32.xlu0 %v778
    %v780 = vpop.xlane.xlu0 %779
    %v781 = vsub.f32 %v749, %v759
    %v782 = vsub.f32 %v750, %v762
    %v783 = vsub.f32 %v751, %v765
    %v784 = vsub.f32 %v752, %v768
    %v785 = vsub.f32 %v753, %v771
    %v786 = vsub.f32 %v754, %v774
    %v787 = vsub.f32 %v755, %v777
    %v788 = vsub.f32 %v756, %v780
    %v789 = vmul.f32 %v781, 1.442695
    %v790 = vpow.pop %v789
    %v791 = vmul.f32 %v782, 1.442695
    %v792 = vpow.pop %v791
    %v793 = vmul.f32 %v783, 1.442695
    %v794 = vpow.pop %v793
    %v795 = vmul.f32 %v784, 1.442695
    %v796 = vpow.pop %v795
    %v797 = vmul.f32 %v785, 1.442695
    %v798 = vpow.pop %v797
    %v799 = vmul.f32 %v786, 1.442695
    %v800 = vpow.pop %v799
    %v801 = vmul.f32 %v787, 1.442695
    %v802 = vpow.pop %v801
    %v803 = vmul.f32 %v788, 1.442695
    %v804 = vpow.pop %v803
    %v805 = vsel %vm325, %v790, 0.0
    %806 = vadd.xlane.f32.xlu0 %v805
    %v807 = vpop.xlane.xlu0 %806
    %v808 = vsel %vm325, %v792, 0.0
    %809 = vadd.xlane.f32.xlu0 %v808
    %v810 = vpop.xlane.xlu0 %809
    %v811 = vsel %vm325, %v794, 0.0
    %812 = vadd.xlane.f32.xlu0 %v811
    %v813 = vpop.xlane.xlu0 %812
    %v814 = vsel %vm325, %v796, 0.0
    %815 = vadd.xlane.f32.xlu0 %v814
    %v816 = vpop.xlane.xlu0 %815
    %v817 = vsel %vm325, %v798, 0.0
    %818 = vadd.xlane.f32.xlu0 %v817
    %v819 = vpop.xlane.xlu0 %818
    %v820 = vsel %vm325, %v800, 0.0
    %821 = vadd.xlane.f32.xlu0 %v820
    %v822 = vpop.xlane.xlu0 %821
    %v823 = vsel %vm325, %v802, 0.0
    %824 = vadd.xlane.f32.xlu0 %v823
    %v825 = vpop.xlane.xlu0 %824
    %v826 = vsel %vm325, %v804, 0.0
    %827 = vadd.xlane.f32.xlu0 %v826
    %v828 = vpop.xlane.xlu0 %827
    %v829 = vrcp.pop %v807
    %v830 = vrcp.pop %v810
    %v831 = vrcp.pop %v813
    %v832 = vrcp.pop %v816
    %v833 = vrcp.pop %v819
    %v834 = vrcp.pop %v822
    %v835 = vrcp.pop %v825
    %v836 = vrcp.pop %v828
    %v837 = vmul.f32 %v790, %v829
    %v838 = vmul.f32 %v792, %v830
    %v839 = vmul.f32 %v794, %v831
    %v840 = vmul.f32 %v796, %v832
    %v841 = vmul.f32 %v798, %v833
    %v842 = vmul.f32 %v800, %v834
    %v843 = vmul.f32 %v802, %v835
    %v844 = vmul.f32 %v804, %v836
    %853 = vrot.lane.b32.xlu0 %v128, 112
    %v854 = vpop.permute.xlu0 %853
    %855 = vrot.lane.b32.xlu0 %v133, 112
    %v856 = vpop.permute.xlu0 %855
    %857 = vrot.lane.b32.xlu0 %v138, 112
    %v858 = vpop.permute.xlu0 %857
    %859 = vrot.lane.b32.xlu0 %v143, 112
    %v860 = vpop.permute.xlu0 %859
    %861 = vrot.lane.b32.xlu0 %v148, 112
    %v862 = vpop.permute.xlu0 %861
    %863 = vrot.lane.b32.xlu0 %v153, 112
    %v864 = vpop.permute.xlu0 %863
    %865 = vrot.lane.b32.xlu0 %v158, 112
    %v866 = vpop.permute.xlu0 %865
    %867 = vrot.lane.b32.xlu0 %v163, 112
    %v868 = vpop.permute.xlu0 %867
    %v878 = vsel %vm325, %v837, 0
    %v881 = vsel %vm325, %v838, 0
    %v884 = vsel %vm325, %v839, 0
    %v887 = vsel %vm325, %v840, 0
    %v890 = vsel %vm325, %v841, 0
    %v893 = vsel %vm325, %v842, 0
    %v896 = vsel %vm325, %v843, 0
    %v899 = vsel %vm325, %v844, 0
    %901 = vmatprep.subr.mxu0 0.0
    %902 = vmatpush1.msra.mxu0 %v854
    %903 = vmatprep.subr.mxu0 0.0
    %904 = vmatpush1.msra.mxu0 %v856
    %905 = vmatprep.subr.mxu0 0.0
    %906 = vmatpush1.msra.mxu0 %v858
    %907 = vmatprep.subr.mxu0 0.0
    %908 = vmatpush1.msra.mxu0 %v860
    %909 = vmatprep.subr.mxu0 0.0
    %910 = vmatpush1.msra.mxu0 %v862
    %911 = vmatprep.subr.mxu0 0.0
    %912 = vmatpush1.msra.mxu0 %v864
    %913 = vmatprep.subr.mxu0 0.0
    %914 = vmatpush1.msra.mxu0 %v866
    %915 = vmatprep.subr.mxu0 0.0
    %916 = vmatpush1.msra.mxu0 %v868
    %917 = vmatprep.subr.mxu0 0.0
    %918 = vmatpush1.msra.mxu0 0.0
    %919 = vmatprep.subr.mxu0 0.0
    %920 = vmatpush1.msra.mxu0 0.0
    %921 = vmatprep.subr.mxu0 0.0
    %922 = vmatpush1.msra.mxu0 0.0
    %923 = vmatprep.subr.mxu0 0.0
    %924 = vmatpush1.msra.mxu0 0.0
    %925 = vmatprep.subr.mxu0 0.0
    %926 = vmatpush1.msra.mxu0 0.0
    %927 = vmatprep.subr.mxu0 0.0
    %928 = vmatpush1.msra.mxu0 0.0
    %929 = vmatprep.subr.mxu0 0.0
    %930 = vmatpush1.msra.mxu0 0.0
    %931 = vmatprep.subr.mxu0 0.0
    %932 = vmatpush1.msra.mxu0 0.0
    %933 = vmatprep.subr.mxu0 0.0
    %934 = vmatpush1.msra.mxu0 0.0
    %935 = vmatprep.subr.mxu0 0.0
    %936 = vmatpush1.msra.mxu0 0.0
    %937 = vmatprep.subr.mxu0 0.0
    %938 = vmatpush1.msra.mxu0 0.0
    %939 = vmatprep.subr.mxu0 0.0
    %940 = vmatpush1.msra.mxu0 0.0
    %941 = vmatprep.subr.mxu0 0.0
    %942 = vmatpush1.msra.mxu0 0.0
    %943 = vmatprep.subr.mxu0 0.0
    %944 = vmatpush1.msra.mxu0 0.0
    %945 = vmatprep.subr.mxu0 0.0
    %946 = vmatpush1.msra.mxu0 0.0
    %947 = vmatprep.subr.mxu0 0.0
    %948 = vmatpush1.msra.mxu0 0.0
    %949 = vmatprep.subr.mxu0 0.0
    %950 = vmatpush1.msra.mxu0 0.0
    %951 = vmatprep.subr.mxu0 0.0
    %952 = vmatpush1.msra.mxu0 0.0
    %953 = vmatprep.subr.mxu0 0.0
    %954 = vmatpush1.msra.mxu0 0.0
    %955 = vmatprep.subr.mxu0 0.0
    %956 = vmatpush1.msra.mxu0 0.0
    %957 = vmatprep.subr.mxu0 0.0
    %958 = vmatpush1.msra.mxu0 0.0
    %959 = vmatprep.subr.mxu0 0.0
    %960 = vmatpush1.msra.mxu0 0.0
    %961 = vmatprep.subr.mxu0 0.0
    %962 = vmatpush1.msra.mxu0 0.0
    %963 = vmatprep.subr.mxu0 0.0
    %964 = vmatpush1.msra.mxu0 0.0
    %965 = vmatprep.mubr.f32.mxu0 0.0
    %966 = vmatmul.mubr.f32.gmra.mrb[0].mxu0 %v878
    %v967 = vpop.f32.mrb[0].mxu0
    %v968 = vadd.f32 0.0, %v967
    %v969 = vpop.f32.mrb[0].mxu0
    %970 = vmatprep.mubr.f32.mxu0 0.0
    %971 = vmatmul.mubr.f32.gmra.mrb[0].mxu0 %v881
    %v972 = vpop.f32.mrb[0].mxu0
    %v973 = vadd.f32 0.0, %v972
    %v974 = vpop.f32.mrb[0].mxu0
    %975 = vmatprep.mubr.f32.mxu0 0.0
    %976 = vmatmul.mubr.f32.gmra.mrb[0].mxu0 %v884
    %v977 = vpop.f32.mrb[0].mxu0
    %v978 = vadd.f32 0.0, %v977
    %v979 = vpop.f32.mrb[0].mxu0
    %980 = vmatprep.mubr.f32.mxu0 0.0
    %981 = vmatmul.mubr.f32.gmra.mrb[0].mxu0 %v887
    %v982 = vpop.f32.mrb[0].mxu0
    %v983 = vadd.f32 0.0, %v982
    %v984 = vpop.f32.mrb[0].mxu0
    %985 = vmatprep.mubr.f32.mxu0 0.0
    %986 = vmatmul.mubr.f32.gmra.mrb[0].mxu0 %v890
    %v987 = vpop.f32.mrb[0].mxu0
    %v988 = vadd.f32 0.0, %v987
    %v989 = vpop.f32.mrb[0].mxu0
    %990 = vmatprep.mubr.f32.mxu0 0.0
    %991 = vmatmul.mubr.f32.gmra.mrb[0].mxu0 %v893
    %v992 = vpop.f32.mrb[0].mxu0
    %v993 = vadd.f32 0.0, %v992
    %v994 = vpop.f32.mrb[0].mxu0
    %995 = vmatprep.mubr.f32.mxu0 0.0
    %996 = vmatmul.mubr.f32.gmra.mrb[0].mxu0 %v896
    %v997 = vpop.f32.mrb[0].mxu0
    %v998 = vadd.f32 0.0, %v997
    %v999 = vpop.f32.mrb[0].mxu0
    %1000 = vmatprep.mubr.f32.mxu0 0.0
    %1001 = vmatmul.mubr.f32.gmra.mrb[0].mxu0 %v899
    %v1002 = vpop.f32.mrb[0].mxu0
    %v1003 = vadd.f32 0.0, %v1002
    %v1004 = vpop.f32.mrb[0].mxu0
    %1005 = vdwg.mxu0
    %v1006 = vld [vmem:[%s2 + $0x2] sm:$0x1]
    %v1007 = vlaneseq
    %v1008 = vshrl.u32 %v1007, 7
    %v1009 = vsub.s32 0, %v1008
    %v1010 = vrot.slane %v1006, %v1009
    %1012 = vrot.lane.b32.xlu0 %v1010, 32
    %v1013 = vpop.permute.xlu0 %1012
    %v1015 = vmul.f32 %v128, %v1013
    %v1016 = vmul.f32 %v133, %v1013
    %v1017 = vmul.f32 %v138, %v1013
    %v1018 = vmul.f32 %v143, %v1013
    %v1019 = vmul.f32 %v148, %v1013
    %v1020 = vmul.f32 %v153, %v1013
    %v1021 = vmul.f32 %v158, %v1013
    %v1022 = vmul.f32 %v163, %v1013
    %1031 = vrot.lane.b32.xlu0 %v1015, 96
    %v1032 = vpop.permute.xlu0 %1031
    %1033 = vrot.lane.b32.xlu0 %v1016, 96
    %v1034 = vpop.permute.xlu0 %1033
    %1035 = vrot.lane.b32.xlu0 %v1017, 96
    %v1036 = vpop.permute.xlu0 %1035
    %1037 = vrot.lane.b32.xlu0 %v1018, 96
    %v1038 = vpop.permute.xlu0 %1037
    %1039 = vrot.lane.b32.xlu0 %v1019, 96
    %v1040 = vpop.permute.xlu0 %1039
    %1041 = vrot.lane.b32.xlu0 %v1020, 96
    %v1042 = vpop.permute.xlu0 %1041
    %1043 = vrot.lane.b32.xlu0 %v1021, 96
    %v1044 = vpop.permute.xlu0 %1043
    %1045 = vrot.lane.b32.xlu0 %v1022, 96
    %v1046 = vpop.permute.xlu0 %1045
    %v1055 = vsel %vm195, %v1032, 0.0
    %1056 = vadd.xlane.f32.xlu0 %v1055
    %v1057 = vpop.xlane.xlu0 %1056
    %v1058 = vsel %vm195, %v1034, 0.0
    %1059 = vadd.xlane.f32.xlu0 %v1058
    %v1060 = vpop.xlane.xlu0 %1059
    %v1061 = vsel %vm195, %v1036, 0.0
    %1062 = vadd.xlane.f32.xlu0 %v1061
    %v1063 = vpop.xlane.xlu0 %1062
    %v1064 = vsel %vm195, %v1038, 0.0
    %1065 = vadd.xlane.f32.xlu0 %v1064
    %v1066 = vpop.xlane.xlu0 %1065
    %v1067 = vsel %vm195, %v1040, 0.0
    %1068 = vadd.xlane.f32.xlu0 %v1067
    %v1069 = vpop.xlane.xlu0 %1068
    %v1070 = vsel %vm195, %v1042, 0.0
    %1071 = vadd.xlane.f32.xlu0 %v1070
    %v1072 = vpop.xlane.xlu0 %1071
    %v1073 = vsel %vm195, %v1044, 0.0
    %1074 = vadd.xlane.f32.xlu0 %v1073
    %v1075 = vpop.xlane.xlu0 %1074
    %v1076 = vsel %vm195, %v1046, 0.0
    %1077 = vadd.xlane.f32.xlu0 %v1076
    %v1078 = vpop.xlane.xlu0 %1077
    %v1079 = vld [vmem:[%s3 + $0x2] sm:$0x1]
    %v1080 = vlaneseq
    %v1081 = vshrl.u32 %v1080, 7
    %v1082 = vsub.s32 0, %v1081
    %v1083 = vrot.slane %v1079, %v1082
    %1085 = vrot.lane.b32.xlu0 %v1083, 32
    %v1086 = vpop.permute.xlu0 %1085
    %v1088 = vmul.f32 %v128, %v1086
    %v1089 = vmul.f32 %v133, %v1086
    %v1090 = vmul.f32 %v138, %v1086
    %v1091 = vmul.f32 %v143, %v1086
    %v1092 = vmul.f32 %v148, %v1086
    %v1093 = vmul.f32 %v153, %v1086
    %v1094 = vmul.f32 %v158, %v1086
    %v1095 = vmul.f32 %v163, %v1086
    %1104 = vrot.lane.b32.xlu0 %v1088, 96
    %v1105 = vpop.permute.xlu0 %1104
    %1106 = vrot.lane.b32.xlu0 %v1089, 96
    %v1107 = vpop.permute.xlu0 %1106
    %1108 = vrot.lane.b32.xlu0 %v1090, 96
    %v1109 = vpop.permute.xlu0 %1108
    %1110 = vrot.lane.b32.xlu0 %v1091, 96
    %v1111 = vpop.permute.xlu0 %1110
    %1112 = vrot.lane.b32.xlu0 %v1092, 96
    %v1113 = vpop.permute.xlu0 %1112
    %1114 = vrot.lane.b32.xlu0 %v1093, 96
    %v1115 = vpop.permute.xlu0 %1114
    %1116 = vrot.lane.b32.xlu0 %v1094, 96
    %v1117 = vpop.permute.xlu0 %1116
    %1118 = vrot.lane.b32.xlu0 %v1095, 96
    %v1119 = vpop.permute.xlu0 %1118
    %v1128 = vsel %vm195, %v1105, 0.0
    %1129 = vadd.xlane.f32.xlu0 %v1128
    %v1130 = vpop.xlane.xlu0 %1129
    %v1131 = vsel %vm195, %v1107, 0.0
    %1132 = vadd.xlane.f32.xlu0 %v1131
    %v1133 = vpop.xlane.xlu0 %1132
    %v1134 = vsel %vm195, %v1109, 0.0
    %1135 = vadd.xlane.f32.xlu0 %v1134
    %v1136 = vpop.xlane.xlu0 %1135
    %v1137 = vsel %vm195, %v1111, 0.0
    %1138 = vadd.xlane.f32.xlu0 %v1137
    %v1139 = vpop.xlane.xlu0 %1138
    %v1140 = vsel %vm195, %v1113, 0.0
    %1141 = vadd.xlane.f32.xlu0 %v1140
    %v1142 = vpop.xlane.xlu0 %1141
    %v1143 = vsel %vm195, %v1115, 0.0
    %1144 = vadd.xlane.f32.xlu0 %v1143
    %v1145 = vpop.xlane.xlu0 %1144
    %v1146 = vsel %vm195, %v1117, 0.0
    %1147 = vadd.xlane.f32.xlu0 %v1146
    %v1148 = vpop.xlane.xlu0 %1147
    %v1149 = vsel %vm195, %v1119, 0.0
    %1150 = vadd.xlane.f32.xlu0 %v1149
    %v1151 = vpop.xlane.xlu0 %1150
    %1152 = vxpose.xlu0.b32.start [1/16] %v1057, 128
    %1153 = vxpose.xlu0.b32.cont [2/16] %v1060, 128
    %1154 = vxpose.xlu0.b32.cont [3/16] %v1063, 128
    %1155 = vxpose.xlu0.b32.cont [4/16] %v1066, 128
    %1156 = vxpose.xlu0.b32.cont [5/16] %v1069, 128
    %1157 = vxpose.xlu0.b32.cont [6/16] %v1072, 128
    %1158 = vxpose.xlu0.b32.cont [7/16] %v1075, 128
    %1159 = vxpose.xlu0.b32.cont [8/16] %v1078, 128
    %1160 = vxpose.xlu0.b32.cont [9/16] 0.0, 128
    %1161 = vxpose.xlu0.b32.cont [10/16] 0.0, 128
    %1162 = vxpose.xlu0.b32.cont [11/16] 0.0, 128
    %1163 = vxpose.xlu0.b32.cont [12/16] 0.0, 128
    %1164 = vxpose.xlu0.b32.cont [13/16] 0.0, 128
    %1165 = vxpose.xlu0.b32.cont [14/16] 0.0, 128
    %1166 = vxpose.xlu0.b32.cont [15/16] 0.0, 128
    %1167 = vxpose.xlu0.b32.end [16/16] 0.0, 128
    %v1168 = vpop.trf.xlu0
    %v1169 = vpop.trf.xlu0
    %v1170 = vpop.trf.xlu0
    %v1171 = vpop.trf.xlu0
    %v1172 = vpop.trf.xlu0
    %v1173 = vpop.trf.xlu0
    %v1174 = vpop.trf.xlu0
    %v1175 = vpop.trf.xlu0
    %v1176 = vpop.trf.xlu0
    %v1177 = vpop.trf.xlu0
    %v1178 = vpop.trf.xlu0
    %v1179 = vpop.trf.xlu0
    %v1180 = vpop.trf.xlu0
    %v1181 = vpop.trf.xlu0
    %v1182 = vpop.trf.xlu0
    %v1183 = vpop.trf.xlu0
    %v1184 = vlaneseq
    %v1185 = vshrl.u32 %v1184, 7
    %v1186 = vsub.s32 0, %v1185
    %v1187 = vrot.slane %v1168, %v1186
    %v1188 = vadd.f32 %v1130, %v1187
    %v1189 = vadd.f32 %v1133, %v1187
    %v1190 = vadd.f32 %v1136, %v1187
    %v1191 = vadd.f32 %v1139, %v1187
    %v1192 = vadd.f32 %v1142, %v1187
    %v1193 = vadd.f32 %v1145, %v1187
    %v1194 = vadd.f32 %v1148, %v1187
    %v1195 = vadd.f32 %v1151, %v1187
    %v1196 = vmul.f32 %v1188, 0.2
    %v1197 = vmul.f32 %v1189, 0.2
    %v1198 = vmul.f32 %v1190, 0.2
    %v1199 = vmul.f32 %v1191, 0.2
    %v1200 = vmul.f32 %v1192, 0.2
    %v1201 = vmul.f32 %v1193, 0.2
    %v1202 = vmul.f32 %v1194, 0.2
    %v1203 = vmul.f32 %v1195, 0.2
    %v1204 = vmax.f32 %v1188, %v1196
    %v1205 = vmax.f32 %v1189, %v1197
    %v1206 = vmax.f32 %v1190, %v1198
    %v1207 = vmax.f32 %v1191, %v1199
    %v1208 = vmax.f32 %v1192, %v1200
    %v1209 = vmax.f32 %v1193, %v1201
    %v1210 = vmax.f32 %v1194, %v1202
    %v1211 = vmax.f32 %v1195, %v1203
    %v1212 = vsel %vm174, %v1204, -1e+30
    %v1213 = vsel %vm175, %v1205, -1e+30
    %v1214 = vsel %vm176, %v1206, -1e+30
    %v1215 = vsel %vm177, %v1207, -1e+30
    %v1216 = vsel %vm178, %v1208, -1e+30
    %v1217 = vsel %vm179, %v1209, -1e+30
    %v1218 = vsel %vm180, %v1210, -1e+30
    %v1219 = vsel %vm181, %v1211, -1e+30
    %v1220 = vsel %vm325, %v1212, -inf
    %1221 = vmax.xlane.f32.xlu0 %v1220
    %v1222 = vpop.xlane.xlu0 %1221
    %v1223 = vsel %vm325, %v1213, -inf
    %1224 = vmax.xlane.f32.xlu0 %v1223
    %v1225 = vpop.xlane.xlu0 %1224
    %v1226 = vsel %vm325, %v1214, -inf
    %1227 = vmax.xlane.f32.xlu0 %v1226
    %v1228 = vpop.xlane.xlu0 %1227
    %v1229 = vsel %vm325, %v1215, -inf
    %1230 = vmax.xlane.f32.xlu0 %v1229
    %v1231 = vpop.xlane.xlu0 %1230
    %v1232 = vsel %vm325, %v1216, -inf
    %1233 = vmax.xlane.f32.xlu0 %v1232
    %v1234 = vpop.xlane.xlu0 %1233
    %v1235 = vsel %vm325, %v1217, -inf
    %1236 = vmax.xlane.f32.xlu0 %v1235
    %v1237 = vpop.xlane.xlu0 %1236
    %v1238 = vsel %vm325, %v1218, -inf
    %1239 = vmax.xlane.f32.xlu0 %v1238
    %v1240 = vpop.xlane.xlu0 %1239
    %v1241 = vsel %vm325, %v1219, -inf
    %1242 = vmax.xlane.f32.xlu0 %v1241
    %v1243 = vpop.xlane.xlu0 %1242
    %v1244 = vsub.f32 %v1212, %v1222
    %v1245 = vsub.f32 %v1213, %v1225
    %v1246 = vsub.f32 %v1214, %v1228
    %v1247 = vsub.f32 %v1215, %v1231
    %v1248 = vsub.f32 %v1216, %v1234
    %v1249 = vsub.f32 %v1217, %v1237
    %v1250 = vsub.f32 %v1218, %v1240
    %v1251 = vsub.f32 %v1219, %v1243
    %v1252 = vmul.f32 %v1244, 1.442695
    %v1253 = vpow.pop %v1252
    %v1254 = vmul.f32 %v1245, 1.442695
    %v1255 = vpow.pop %v1254
    %v1256 = vmul.f32 %v1246, 1.442695
    %v1257 = vpow.pop %v1256
    %v1258 = vmul.f32 %v1247, 1.442695
    %v1259 = vpow.pop %v1258
    %v1260 = vmul.f32 %v1248, 1.442695
    %v1261 = vpow.pop %v1260
    %v1262 = vmul.f32 %v1249, 1.442695
    %v1263 = vpow.pop %v1262
    %v1264 = vmul.f32 %v1250, 1.442695
    %v1265 = vpow.pop %v1264
    %v1266 = vmul.f32 %v1251, 1.442695
    %v1267 = vpow.pop %v1266
    %v1268 = vsel %vm325, %v1253, 0.0
    %1269 = vadd.xlane.f32.xlu0 %v1268
    %v1270 = vpop.xlane.xlu0 %1269
    %v1271 = vsel %vm325, %v1255, 0.0
    %1272 = vadd.xlane.f32.xlu0 %v1271
    %v1273 = vpop.xlane.xlu0 %1272
    %v1274 = vsel %vm325, %v1257, 0.0
    %1275 = vadd.xlane.f32.xlu0 %v1274
    %v1276 = vpop.xlane.xlu0 %1275
    %v1277 = vsel %vm325, %v1259, 0.0
    %1278 = vadd.xlane.f32.xlu0 %v1277
    %v1279 = vpop.xlane.xlu0 %1278
    %v1280 = vsel %vm325, %v1261, 0.0
    %1281 = vadd.xlane.f32.xlu0 %v1280
    %v1282 = vpop.xlane.xlu0 %1281
    %v1283 = vsel %vm325, %v1263, 0.0
    %1284 = vadd.xlane.f32.xlu0 %v1283
    %v1285 = vpop.xlane.xlu0 %1284
    %v1286 = vsel %vm325, %v1265, 0.0
    %1287 = vadd.xlane.f32.xlu0 %v1286
    %v1288 = vpop.xlane.xlu0 %1287
    %v1289 = vsel %vm325, %v1267, 0.0
    %1290 = vadd.xlane.f32.xlu0 %v1289
    %v1291 = vpop.xlane.xlu0 %1290
    %v1292 = vrcp.pop %v1270
    %v1293 = vrcp.pop %v1273
    %v1294 = vrcp.pop %v1276
    %v1295 = vrcp.pop %v1279
    %v1296 = vrcp.pop %v1282
    %v1297 = vrcp.pop %v1285
    %v1298 = vrcp.pop %v1288
    %v1299 = vrcp.pop %v1291
    %v1300 = vmul.f32 %v1253, %v1292
    %v1301 = vmul.f32 %v1255, %v1293
    %v1302 = vmul.f32 %v1257, %v1294
    %v1303 = vmul.f32 %v1259, %v1295
    %v1304 = vmul.f32 %v1261, %v1296
    %v1305 = vmul.f32 %v1263, %v1297
    %v1306 = vmul.f32 %v1265, %v1298
    %v1307 = vmul.f32 %v1267, %v1299
    %1308 = vrot.lane.b32.xlu0 %v128, 96
    %v1309 = vpop.permute.xlu0 %1308
    %1310 = vrot.lane.b32.xlu0 %v133, 96
    %v1311 = vpop.permute.xlu0 %1310
    %1312 = vrot.lane.b32.xlu0 %v138, 96
    %v1313 = vpop.permute.xlu0 %1312
    %1314 = vrot.lane.b32.xlu0 %v143, 96
    %v1315 = vpop.permute.xlu0 %1314
    %1316 = vrot.lane.b32.xlu0 %v148, 96
    %v1317 = vpop.permute.xlu0 %1316
    %1318 = vrot.lane.b32.xlu0 %v153, 96
    %v1319 = vpop.permute.xlu0 %1318
    %1320 = vrot.lane.b32.xlu0 %v158, 96
    %v1321 = vpop.permute.xlu0 %1320
    %1322 = vrot.lane.b32.xlu0 %v163, 96
    %v1323 = vpop.permute.xlu0 %1322
    %v1333 = vsel %vm325, %v1300, 0
    %v1336 = vsel %vm325, %v1301, 0
    %v1339 = vsel %vm325, %v1302, 0
    %v1342 = vsel %vm325, %v1303, 0
    %v1345 = vsel %vm325, %v1304, 0
    %v1348 = vsel %vm325, %v1305, 0
    %v1351 = vsel %vm325, %v1306, 0
    %v1354 = vsel %vm325, %v1307, 0
    %1356 = vmatprep.subr.mxu0 0.0
    %1357 = vmatpush1.msra.mxu0 %v1309
    %1358 = vmatprep.subr.mxu0 0.0
    %1359 = vmatpush1.msra.mxu0 %v1311
    %1360 = vmatprep.subr.mxu0 0.0
    %1361 = vmatpush1.msra.mxu0 %v1313
    %1362 = vmatprep.subr.mxu0 0.0
    %1363 = vmatpush1.msra.mxu0 %v1315
    %1364 = vmatprep.subr.mxu0 0.0
    %1365 = vmatpush1.msra.mxu0 %v1317
    %1366 = vmatprep.subr.mxu0 0.0
    %1367 = vmatpush1.msra.mxu0 %v1319
    %1368 = vmatprep.subr.mxu0 0.0
    %1369 = vmatpush1.msra.mxu0 %v1321
    %1370 = vmatprep.subr.mxu0 0.0
    %1371 = vmatpush1.msra.mxu0 %v1323
    %1372 = vmatprep.subr.mxu0 0.0
    %1373 = vmatpush1.msra.mxu0 0.0
    %1374 = vmatprep.subr.mxu0 0.0
    %1375 = vmatpush1.msra.mxu0 0.0
    %1376 = vmatprep.subr.mxu0 0.0
    %1377 = vmatpush1.msra.mxu0 0.0
    %1378 = vmatprep.subr.mxu0 0.0
    %1379 = vmatpush1.msra.mxu0 0.0
    %1380 = vmatprep.subr.mxu0 0.0
    %1381 = vmatpush1.msra.mxu0 0.0
    %1382 = vmatprep.subr.mxu0 0.0
    %1383 = vmatpush1.msra.mxu0 0.0
    %1384 = vmatprep.subr.mxu0 0.0
    %1385 = vmatpush1.msra.mxu0 0.0
    %1386 = vmatprep.subr.mxu0 0.0
    %1387 = vmatpush1.msra.mxu0 0.0
    %1388 = vmatprep.subr.mxu0 0.0
    %1389 = vmatpush1.msra.mxu0 0.0
    %1390 = vmatprep.subr.mxu0 0.0
    %1391 = vmatpush1.msra.mxu0 0.0
    %1392 = vmatprep.subr.mxu0 0.0
    %1393 = vmatpush1.msra.mxu0 0.0
    %1394 = vmatprep.subr.mxu0 0.0
    %1395 = vmatpush1.msra.mxu0 0.0
    %1396 = vmatprep.subr.mxu0 0.0
    %1397 = vmatpush1.msra.mxu0 0.0
    %1398 = vmatprep.subr.mxu0 0.0
    %1399 = vmatpush1.msra.mxu0 0.0
    %1400 = vmatprep.subr.mxu0 0.0
    %1401 = vmatpush1.msra.mxu0 0.0
    %1402 = vmatprep.subr.mxu0 0.0
    %1403 = vmatpush1.msra.mxu0 0.0
    %1404 = vmatprep.subr.mxu0 0.0
    %1405 = vmatpush1.msra.mxu0 0.0
    %1406 = vmatprep.subr.mxu0 0.0
    %1407 = vmatpush1.msra.mxu0 0.0
    %1408 = vmatprep.subr.mxu0 0.0
    %1409 = vmatpush1.msra.mxu0 0.0
    %1410 = vmatprep.subr.mxu0 0.0
    %1411 = vmatpush1.msra.mxu0 0.0
    %1412 = vmatprep.subr.mxu0 0.0
    %1413 = vmatpush1.msra.mxu0 0.0
    %1414 = vmatprep.subr.mxu0 0.0
    %1415 = vmatpush1.msra.mxu0 0.0
    %1416 = vmatprep.subr.mxu0 0.0
    %1417 = vmatpush1.msra.mxu0 0.0
    %1418 = vmatprep.subr.mxu0 0.0
    %1419 = vmatpush1.msra.mxu0 0.0
    %1420 = vmatprep.mubr.f32.mxu0 0.0
    %1421 = vmatmul.mubr.f32.gmra.mrb[0].mxu0 %v1333
    %v1422 = vpop.f32.mrb[0].mxu0
    %v1423 = vadd.f32 0.0, %v1422
    %v1424 = vpop.f32.mrb[0].mxu0
    %1425 = vmatprep.mubr.f32.mxu0 0.0
    %1426 = vmatmul.mubr.f32.gmra.mrb[0].mxu0 %v1336
    %v1427 = vpop.f32.mrb[0].mxu0
    %v1428 = vadd.f32 0.0, %v1427
    %v1429 = vpop.f32.mrb[0].mxu0
    %1430 = vmatprep.mubr.f32.mxu0 0.0
    %1431 = vmatmul.mubr.f32.gmra.mrb[0].mxu0 %v1339
    %v1432 = vpop.f32.mrb[0].mxu0
    %v1433 = vadd.f32 0.0, %v1432
    %v1434 = vpop.f32.mrb[0].mxu0
    %1435 = vmatprep.mubr.f32.mxu0 0.0
    %1436 = vmatmul.mubr.f32.gmra.mrb[0].mxu0 %v1342
    %v1437 = vpop.f32.mrb[0].mxu0
    %v1438 = vadd.f32 0.0, %v1437
    %v1439 = vpop.f32.mrb[0].mxu0
    %1440 = vmatprep.mubr.f32.mxu0 0.0
    %1441 = vmatmul.mubr.f32.gmra.mrb[0].mxu0 %v1345
    %v1442 = vpop.f32.mrb[0].mxu0
    %v1443 = vadd.f32 0.0, %v1442
    %v1444 = vpop.f32.mrb[0].mxu0
    %1445 = vmatprep.mubr.f32.mxu0 0.0
    %1446 = vmatmul.mubr.f32.gmra.mrb[0].mxu0 %v1348
    %v1447 = vpop.f32.mrb[0].mxu0
    %v1448 = vadd.f32 0.0, %v1447
    %v1449 = vpop.f32.mrb[0].mxu0
    %1450 = vmatprep.mubr.f32.mxu0 0.0
    %1451 = vmatmul.mubr.f32.gmra.mrb[0].mxu0 %v1351
    %v1452 = vpop.f32.mrb[0].mxu0
    %v1453 = vadd.f32 0.0, %v1452
    %v1454 = vpop.f32.mrb[0].mxu0
    %1455 = vmatprep.mubr.f32.mxu0 0.0
    %1456 = vmatmul.mubr.f32.gmra.mrb[0].mxu0 %v1354
    %v1457 = vpop.f32.mrb[0].mxu0
    %v1458 = vadd.f32 0.0, %v1457
    %v1459 = vpop.f32.mrb[0].mxu0
    %1460 = vdwg.mxu0
    %v1461 = vld [vmem:[%s2 + $0x3] sm:$0x1]
    %v1462 = vlaneseq
    %v1463 = vshrl.u32 %v1462, 7
    %v1464 = vsub.s32 0, %v1463
    %v1465 = vrot.slane %v1461, %v1464
    %1467 = vrot.lane.b32.xlu0 %v1465, 48
    %v1468 = vpop.permute.xlu0 %1467
    %v1470 = vmul.f32 %v128, %v1468
    %v1471 = vmul.f32 %v133, %v1468
    %v1472 = vmul.f32 %v138, %v1468
    %v1473 = vmul.f32 %v143, %v1468
    %v1474 = vmul.f32 %v148, %v1468
    %v1475 = vmul.f32 %v153, %v1468
    %v1476 = vmul.f32 %v158, %v1468
    %v1477 = vmul.f32 %v163, %v1468
    %1486 = vrot.lane.b32.xlu0 %v1470, 80
    %v1487 = vpop.permute.xlu0 %1486
    %1488 = vrot.lane.b32.xlu0 %v1471, 80
    %v1489 = vpop.permute.xlu0 %1488
    %1490 = vrot.lane.b32.xlu0 %v1472, 80
    %v1491 = vpop.permute.xlu0 %1490
    %1492 = vrot.lane.b32.xlu0 %v1473, 80
    %v1493 = vpop.permute.xlu0 %1492
    %1494 = vrot.lane.b32.xlu0 %v1474, 80
    %v1495 = vpop.permute.xlu0 %1494
    %1496 = vrot.lane.b32.xlu0 %v1475, 80
    %v1497 = vpop.permute.xlu0 %1496
    %1498 = vrot.lane.b32.xlu0 %v1476, 80
    %v1499 = vpop.permute.xlu0 %1498
    %1500 = vrot.lane.b32.xlu0 %v1477, 80
    %v1501 = vpop.permute.xlu0 %1500
    %v1510 = vsel %vm195, %v1487, 0.0
    %1511 = vadd.xlane.f32.xlu0 %v1510
    %v1512 = vpop.xlane.xlu0 %1511
    %v1513 = vsel %vm195, %v1489, 0.0
    %1514 = vadd.xlane.f32.xlu0 %v1513
    %v1515 = vpop.xlane.xlu0 %1514
    %v1516 = vsel %vm195, %v1491, 0.0
    %1517 = vadd.xlane.f32.xlu0 %v1516
    %v1518 = vpop.xlane.xlu0 %1517
    %v1519 = vsel %vm195, %v1493, 0.0
    %1520 = vadd.xlane.f32.xlu0 %v1519
    %v1521 = vpop.xlane.xlu0 %1520
    %v1522 = vsel %vm195, %v1495, 0.0
    %1523 = vadd.xlane.f32.xlu0 %v1522
    %v1524 = vpop.xlane.xlu0 %1523
    %v1525 = vsel %vm195, %v1497, 0.0
    %1526 = vadd.xlane.f32.xlu0 %v1525
    %v1527 = vpop.xlane.xlu0 %1526
    %v1528 = vsel %vm195, %v1499, 0.0
    %1529 = vadd.xlane.f32.xlu0 %v1528
    %v1530 = vpop.xlane.xlu0 %1529
    %v1531 = vsel %vm195, %v1501, 0.0
    %1532 = vadd.xlane.f32.xlu0 %v1531
    %v1533 = vpop.xlane.xlu0 %1532
    %v1534 = vld [vmem:[%s3 + $0x3] sm:$0x1]
    %v1535 = vlaneseq
    %v1536 = vshrl.u32 %v1535, 7
    %v1537 = vsub.s32 0, %v1536
    %v1538 = vrot.slane %v1534, %v1537
    %1540 = vrot.lane.b32.xlu0 %v1538, 48
    %v1541 = vpop.permute.xlu0 %1540
    %v1543 = vmul.f32 %v128, %v1541
    %v1544 = vmul.f32 %v133, %v1541
    %v1545 = vmul.f32 %v138, %v1541
    %v1546 = vmul.f32 %v143, %v1541
    %v1547 = vmul.f32 %v148, %v1541
    %v1548 = vmul.f32 %v153, %v1541
    %v1549 = vmul.f32 %v158, %v1541
    %v1550 = vmul.f32 %v163, %v1541
    %1559 = vrot.lane.b32.xlu0 %v1543, 80
    %v1560 = vpop.permute.xlu0 %1559
    %1561 = vrot.lane.b32.xlu0 %v1544, 80
    %v1562 = vpop.permute.xlu0 %1561
    %1563 = vrot.lane.b32.xlu0 %v1545, 80
    %v1564 = vpop.permute.xlu0 %1563
    %1565 = vrot.lane.b32.xlu0 %v1546, 80
    %v1566 = vpop.permute.xlu0 %1565
    %1567 = vrot.lane.b32.xlu0 %v1547, 80
    %v1568 = vpop.permute.xlu0 %1567
    %1569 = vrot.lane.b32.xlu0 %v1548, 80
    %v1570 = vpop.permute.xlu0 %1569
    %1571 = vrot.lane.b32.xlu0 %v1549, 80
    %v1572 = vpop.permute.xlu0 %1571
    %1573 = vrot.lane.b32.xlu0 %v1550, 80
    %v1574 = vpop.permute.xlu0 %1573
    %v1583 = vsel %vm195, %v1560, 0.0
    %1584 = vadd.xlane.f32.xlu0 %v1583
    %v1585 = vpop.xlane.xlu0 %1584
    %v1586 = vsel %vm195, %v1562, 0.0
    %1587 = vadd.xlane.f32.xlu0 %v1586
    %v1588 = vpop.xlane.xlu0 %1587
    %v1589 = vsel %vm195, %v1564, 0.0
    %1590 = vadd.xlane.f32.xlu0 %v1589
    %v1591 = vpop.xlane.xlu0 %1590
    %v1592 = vsel %vm195, %v1566, 0.0
    %1593 = vadd.xlane.f32.xlu0 %v1592
    %v1594 = vpop.xlane.xlu0 %1593
    %v1595 = vsel %vm195, %v1568, 0.0
    %1596 = vadd.xlane.f32.xlu0 %v1595
    %v1597 = vpop.xlane.xlu0 %1596
    %v1598 = vsel %vm195, %v1570, 0.0
    %1599 = vadd.xlane.f32.xlu0 %v1598
    %v1600 = vpop.xlane.xlu0 %1599
    %v1601 = vsel %vm195, %v1572, 0.0
    %1602 = vadd.xlane.f32.xlu0 %v1601
    %v1603 = vpop.xlane.xlu0 %1602
    %v1604 = vsel %vm195, %v1574, 0.0
    %1605 = vadd.xlane.f32.xlu0 %v1604
    %v1606 = vpop.xlane.xlu0 %1605
    %1607 = vxpose.xlu0.b32.start [1/16] %v1512, 128
    %1608 = vxpose.xlu0.b32.cont [2/16] %v1515, 128
    %1609 = vxpose.xlu0.b32.cont [3/16] %v1518, 128
    %1610 = vxpose.xlu0.b32.cont [4/16] %v1521, 128
    %1611 = vxpose.xlu0.b32.cont [5/16] %v1524, 128
    %1612 = vxpose.xlu0.b32.cont [6/16] %v1527, 128
    %1613 = vxpose.xlu0.b32.cont [7/16] %v1530, 128
    %1614 = vxpose.xlu0.b32.cont [8/16] %v1533, 128
    %1615 = vxpose.xlu0.b32.cont [9/16] 0.0, 128
    %1616 = vxpose.xlu0.b32.cont [10/16] 0.0, 128
    %1617 = vxpose.xlu0.b32.cont [11/16] 0.0, 128
    %1618 = vxpose.xlu0.b32.cont [12/16] 0.0, 128
    %1619 = vxpose.xlu0.b32.cont [13/16] 0.0, 128
    %1620 = vxpose.xlu0.b32.cont [14/16] 0.0, 128
    %1621 = vxpose.xlu0.b32.cont [15/16] 0.0, 128
    %1622 = vxpose.xlu0.b32.end [16/16] 0.0, 128
    %v1623 = vpop.trf.xlu0
    %v1624 = vpop.trf.xlu0
    %v1625 = vpop.trf.xlu0
    %v1626 = vpop.trf.xlu0
    %v1627 = vpop.trf.xlu0
    %v1628 = vpop.trf.xlu0
    %v1629 = vpop.trf.xlu0
    %v1630 = vpop.trf.xlu0
    %v1631 = vpop.trf.xlu0
    %v1632 = vpop.trf.xlu0
    %v1633 = vpop.trf.xlu0
    %v1634 = vpop.trf.xlu0
    %v1635 = vpop.trf.xlu0
    %v1636 = vpop.trf.xlu0
    %v1637 = vpop.trf.xlu0
    %v1638 = vpop.trf.xlu0
    %v1639 = vlaneseq
    %v1640 = vshrl.u32 %v1639, 7
    %v1641 = vsub.s32 0, %v1640
    %v1642 = vrot.slane %v1623, %v1641
    %v1643 = vadd.f32 %v1585, %v1642
    %v1644 = vadd.f32 %v1588, %v1642
    %v1645 = vadd.f32 %v1591, %v1642
    %v1646 = vadd.f32 %v1594, %v1642
    %v1647 = vadd.f32 %v1597, %v1642
    %v1648 = vadd.f32 %v1600, %v1642
    %v1649 = vadd.f32 %v1603, %v1642
    %v1650 = vadd.f32 %v1606, %v1642
    %v1651 = vmul.f32 %v1643, 0.2
    %v1652 = vmul.f32 %v1644, 0.2
    %v1653 = vmul.f32 %v1645, 0.2
    %v1654 = vmul.f32 %v1646, 0.2
    %v1655 = vmul.f32 %v1647, 0.2
    %v1656 = vmul.f32 %v1648, 0.2
    %v1657 = vmul.f32 %v1649, 0.2
    %v1658 = vmul.f32 %v1650, 0.2
    %v1659 = vmax.f32 %v1643, %v1651
    %v1660 = vmax.f32 %v1644, %v1652
    %v1661 = vmax.f32 %v1645, %v1653
    %v1662 = vmax.f32 %v1646, %v1654
    %v1663 = vmax.f32 %v1647, %v1655
    %v1664 = vmax.f32 %v1648, %v1656
    %v1665 = vmax.f32 %v1649, %v1657
    %v1666 = vmax.f32 %v1650, %v1658
    %v1667 = vsel %vm174, %v1659, -1e+30
    %v1668 = vsel %vm175, %v1660, -1e+30
    %v1669 = vsel %vm176, %v1661, -1e+30
    %v1670 = vsel %vm177, %v1662, -1e+30
    %v1671 = vsel %vm178, %v1663, -1e+30
    %v1672 = vsel %vm179, %v1664, -1e+30
    %v1673 = vsel %vm180, %v1665, -1e+30
    %v1674 = vsel %vm181, %v1666, -1e+30
    %v1675 = vsel %vm325, %v1667, -inf
    %1676 = vmax.xlane.f32.xlu0 %v1675
    %v1677 = vpop.xlane.xlu0 %1676
    %v1678 = vsel %vm325, %v1668, -inf
    %1679 = vmax.xlane.f32.xlu0 %v1678
    %v1680 = vpop.xlane.xlu0 %1679
    %v1681 = vsel %vm325, %v1669, -inf
    %1682 = vmax.xlane.f32.xlu0 %v1681
    %v1683 = vpop.xlane.xlu0 %1682
    %v1684 = vsel %vm325, %v1670, -inf
    %1685 = vmax.xlane.f32.xlu0 %v1684
    %v1686 = vpop.xlane.xlu0 %1685
    %v1687 = vsel %vm325, %v1671, -inf
    %1688 = vmax.xlane.f32.xlu0 %v1687
    %v1689 = vpop.xlane.xlu0 %1688
    %v1690 = vsel %vm325, %v1672, -inf
    %1691 = vmax.xlane.f32.xlu0 %v1690
    %v1692 = vpop.xlane.xlu0 %1691
    %v1693 = vsel %vm325, %v1673, -inf
    %1694 = vmax.xlane.f32.xlu0 %v1693
    %v1695 = vpop.xlane.xlu0 %1694
    %v1696 = vsel %vm325, %v1674, -inf
    %1697 = vmax.xlane.f32.xlu0 %v1696
    %v1698 = vpop.xlane.xlu0 %1697
    %v1699 = vsub.f32 %v1667, %v1677
    %v1700 = vsub.f32 %v1668, %v1680
    %v1701 = vsub.f32 %v1669, %v1683
    %v1702 = vsub.f32 %v1670, %v1686
    %v1703 = vsub.f32 %v1671, %v1689
    %v1704 = vsub.f32 %v1672, %v1692
    %v1705 = vsub.f32 %v1673, %v1695
    %v1706 = vsub.f32 %v1674, %v1698
    %v1707 = vmul.f32 %v1699, 1.442695
    %v1708 = vpow.pop %v1707
    %v1709 = vmul.f32 %v1700, 1.442695
    %v1710 = vpow.pop %v1709
    %v1711 = vmul.f32 %v1701, 1.442695
    %v1712 = vpow.pop %v1711
    %v1713 = vmul.f32 %v1702, 1.442695
    %v1714 = vpow.pop %v1713
    %v1715 = vmul.f32 %v1703, 1.442695
    %v1716 = vpow.pop %v1715
    %v1717 = vmul.f32 %v1704, 1.442695
    %v1718 = vpow.pop %v1717
    %v1719 = vmul.f32 %v1705, 1.442695
    %v1720 = vpow.pop %v1719
    %v1721 = vmul.f32 %v1706, 1.442695
    %v1722 = vpow.pop %v1721
    %v1723 = vsel %vm325, %v1708, 0.0
    %1724 = vadd.xlane.f32.xlu0 %v1723
    %v1725 = vpop.xlane.xlu0 %1724
    %v1726 = vsel %vm325, %v1710, 0.0
    %1727 = vadd.xlane.f32.xlu0 %v1726
    %v1728 = vpop.xlane.xlu0 %1727
    %v1729 = vsel %vm325, %v1712, 0.0
    %1730 = vadd.xlane.f32.xlu0 %v1729
    %v1731 = vpop.xlane.xlu0 %1730
    %v1732 = vsel %vm325, %v1714, 0.0
    %1733 = vadd.xlane.f32.xlu0 %v1732
    %v1734 = vpop.xlane.xlu0 %1733
    %v1735 = vsel %vm325, %v1716, 0.0
    %1736 = vadd.xlane.f32.xlu0 %v1735
    %v1737 = vpop.xlane.xlu0 %1736
    %v1738 = vsel %vm325, %v1718, 0.0
    %1739 = vadd.xlane.f32.xlu0 %v1738
    %v1740 = vpop.xlane.xlu0 %1739
    %v1741 = vsel %vm325, %v1720, 0.0
    %1742 = vadd.xlane.f32.xlu0 %v1741
    %v1743 = vpop.xlane.xlu0 %1742
    %v1744 = vsel %vm325, %v1722, 0.0
    %1745 = vadd.xlane.f32.xlu0 %v1744
    %v1746 = vpop.xlane.xlu0 %1745
    %v1747 = vrcp.pop %v1725
    %v1748 = vrcp.pop %v1728
    %v1749 = vrcp.pop %v1731
    %v1750 = vrcp.pop %v1734
    %v1751 = vrcp.pop %v1737
    %v1752 = vrcp.pop %v1740
    %v1753 = vrcp.pop %v1743
    %v1754 = vrcp.pop %v1746
    %v1755 = vmul.f32 %v1708, %v1747
    %v1756 = vmul.f32 %v1710, %v1748
    %v1757 = vmul.f32 %v1712, %v1749
    %v1758 = vmul.f32 %v1714, %v1750
    %v1759 = vmul.f32 %v1716, %v1751
    %v1760 = vmul.f32 %v1718, %v1752
    %v1761 = vmul.f32 %v1720, %v1753
    %v1762 = vmul.f32 %v1722, %v1754
    %1763 = vrot.lane.b32.xlu0 %v128, 80
    %v1764 = vpop.permute.xlu0 %1763
    %1765 = vrot.lane.b32.xlu0 %v133, 80
    %v1766 = vpop.permute.xlu0 %1765
    %1767 = vrot.lane.b32.xlu0 %v138, 80
    %v1768 = vpop.permute.xlu0 %1767
    %1769 = vrot.lane.b32.xlu0 %v143, 80
    %v1770 = vpop.permute.xlu0 %1769
    %1771 = vrot.lane.b32.xlu0 %v148, 80
    %v1772 = vpop.permute.xlu0 %1771
    %1773 = vrot.lane.b32.xlu0 %v153, 80
    %v1774 = vpop.permute.xlu0 %1773
    %1775 = vrot.lane.b32.xlu0 %v158, 80
    %v1776 = vpop.permute.xlu0 %1775
    %1777 = vrot.lane.b32.xlu0 %v163, 80
    %v1778 = vpop.permute.xlu0 %1777
    %v1788 = vsel %vm325, %v1755, 0
    %v1791 = vsel %vm325, %v1756, 0
    %v1794 = vsel %vm325, %v1757, 0
    %v1797 = vsel %vm325, %v1758, 0
    %v1800 = vsel %vm325, %v1759, 0
    %v1803 = vsel %vm325, %v1760, 0
    %v1806 = vsel %vm325, %v1761, 0
    %v1809 = vsel %vm325, %v1762, 0
    %1811 = vmatprep.subr.mxu0 0.0
    %1812 = vmatpush1.msra.mxu0 %v1764
    %1813 = vmatprep.subr.mxu0 0.0
    %1814 = vmatpush1.msra.mxu0 %v1766
    %1815 = vmatprep.subr.mxu0 0.0
    %1816 = vmatpush1.msra.mxu0 %v1768
    %1817 = vmatprep.subr.mxu0 0.0
    %1818 = vmatpush1.msra.mxu0 %v1770
    %1819 = vmatprep.subr.mxu0 0.0
    %1820 = vmatpush1.msra.mxu0 %v1772
    %1821 = vmatprep.subr.mxu0 0.0
    %1822 = vmatpush1.msra.mxu0 %v1774
    %1823 = vmatprep.subr.mxu0 0.0
    %1824 = vmatpush1.msra.mxu0 %v1776
    %1825 = vmatprep.subr.mxu0 0.0
    %1826 = vmatpush1.msra.mxu0 %v1778
    %1827 = vmatprep.subr.mxu0 0.0
    %1828 = vmatpush1.msra.mxu0 0.0
    %1829 = vmatprep.subr.mxu0 0.0
    %1830 = vmatpush1.msra.mxu0 0.0
    %1831 = vmatprep.subr.mxu0 0.0
    %1832 = vmatpush1.msra.mxu0 0.0
    %1833 = vmatprep.subr.mxu0 0.0
    %1834 = vmatpush1.msra.mxu0 0.0
    %1835 = vmatprep.subr.mxu0 0.0
    %1836 = vmatpush1.msra.mxu0 0.0
    %1837 = vmatprep.subr.mxu0 0.0
    %1838 = vmatpush1.msra.mxu0 0.0
    %1839 = vmatprep.subr.mxu0 0.0
    %1840 = vmatpush1.msra.mxu0 0.0
    %1841 = vmatprep.subr.mxu0 0.0
    %1842 = vmatpush1.msra.mxu0 0.0
    %1843 = vmatprep.subr.mxu0 0.0
    %1844 = vmatpush1.msra.mxu0 0.0
    %1845 = vmatprep.subr.mxu0 0.0
    %1846 = vmatpush1.msra.mxu0 0.0
    %1847 = vmatprep.subr.mxu0 0.0
    %1848 = vmatpush1.msra.mxu0 0.0
    %1849 = vmatprep.subr.mxu0 0.0
    %1850 = vmatpush1.msra.mxu0 0.0
    %1851 = vmatprep.subr.mxu0 0.0
    %1852 = vmatpush1.msra.mxu0 0.0
    %1853 = vmatprep.subr.mxu0 0.0
    %1854 = vmatpush1.msra.mxu0 0.0
    %1855 = vmatprep.subr.mxu0 0.0
    %1856 = vmatpush1.msra.mxu0 0.0
    %1857 = vmatprep.subr.mxu0 0.0
    %1858 = vmatpush1.msra.mxu0 0.0
    %1859 = vmatprep.subr.mxu0 0.0
    %1860 = vmatpush1.msra.mxu0 0.0
    %1861 = vmatprep.subr.mxu0 0.0
    %1862 = vmatpush1.msra.mxu0 0.0
    %1863 = vmatprep.subr.mxu0 0.0
    %1864 = vmatpush1.msra.mxu0 0.0
    %1865 = vmatprep.subr.mxu0 0.0
    %1866 = vmatpush1.msra.mxu0 0.0
    %1867 = vmatprep.subr.mxu0 0.0
    %1868 = vmatpush1.msra.mxu0 0.0
    %1869 = vmatprep.subr.mxu0 0.0
    %1870 = vmatpush1.msra.mxu0 0.0
    %1871 = vmatprep.subr.mxu0 0.0
    %1872 = vmatpush1.msra.mxu0 0.0
    %1873 = vmatprep.subr.mxu0 0.0
    %1874 = vmatpush1.msra.mxu0 0.0
    %1875 = vmatprep.mubr.f32.mxu0 0.0
    %1876 = vmatmul.mubr.f32.gmra.mrb[0].mxu0 %v1788
    %v1877 = vpop.f32.mrb[0].mxu0
    %v1878 = vadd.f32 0.0, %v1877
    %v1879 = vpop.f32.mrb[0].mxu0
    %1880 = vmatprep.mubr.f32.mxu0 0.0
    %1881 = vmatmul.mubr.f32.gmra.mrb[0].mxu0 %v1791
    %v1882 = vpop.f32.mrb[0].mxu0
    %v1883 = vadd.f32 0.0, %v1882
    %v1884 = vpop.f32.mrb[0].mxu0
    %1885 = vmatprep.mubr.f32.mxu0 0.0
    %1886 = vmatmul.mubr.f32.gmra.mrb[0].mxu0 %v1794
    %v1887 = vpop.f32.mrb[0].mxu0
    %v1888 = vadd.f32 0.0, %v1887
    %v1889 = vpop.f32.mrb[0].mxu0
    %1890 = vmatprep.mubr.f32.mxu0 0.0
    %1891 = vmatmul.mubr.f32.gmra.mrb[0].mxu0 %v1797
    %v1892 = vpop.f32.mrb[0].mxu0
    %v1893 = vadd.f32 0.0, %v1892
    %v1894 = vpop.f32.mrb[0].mxu0
    %1895 = vmatprep.mubr.f32.mxu0 0.0
    %1896 = vmatmul.mubr.f32.gmra.mrb[0].mxu0 %v1800
    %v1897 = vpop.f32.mrb[0].mxu0
    %v1898 = vadd.f32 0.0, %v1897
    %v1899 = vpop.f32.mrb[0].mxu0
    %1900 = vmatprep.mubr.f32.mxu0 0.0
    %1901 = vmatmul.mubr.f32.gmra.mrb[0].mxu0 %v1803
    %v1902 = vpop.f32.mrb[0].mxu0
    %v1903 = vadd.f32 0.0, %v1902
    %v1904 = vpop.f32.mrb[0].mxu0
    %1905 = vmatprep.mubr.f32.mxu0 0.0
    %1906 = vmatmul.mubr.f32.gmra.mrb[0].mxu0 %v1806
    %v1907 = vpop.f32.mrb[0].mxu0
    %v1908 = vadd.f32 0.0, %v1907
    %v1909 = vpop.f32.mrb[0].mxu0
    %1910 = vmatprep.mubr.f32.mxu0 0.0
    %1911 = vmatmul.mubr.f32.gmra.mrb[0].mxu0 %v1809
    %v1912 = vpop.f32.mrb[0].mxu0
    %v1913 = vadd.f32 0.0, %v1912
    %v1914 = vpop.f32.mrb[0].mxu0
    %1915 = vdwg.mxu0
    %1924 = vrot.lane.b32.xlu0 %v968, 16
    %v1925 = vpop.permute.xlu0 %1924
    %1926 = vrot.lane.b32.xlu0 %v973, 16
    %v1927 = vpop.permute.xlu0 %1926
    %1928 = vrot.lane.b32.xlu0 %v978, 16
    %v1929 = vpop.permute.xlu0 %1928
    %1930 = vrot.lane.b32.xlu0 %v983, 16
    %v1931 = vpop.permute.xlu0 %1930
    %1932 = vrot.lane.b32.xlu0 %v988, 16
    %v1933 = vpop.permute.xlu0 %1932
    %1934 = vrot.lane.b32.xlu0 %v993, 16
    %v1935 = vpop.permute.xlu0 %1934
    %1936 = vrot.lane.b32.xlu0 %v998, 16
    %v1937 = vpop.permute.xlu0 %1936
    %1938 = vrot.lane.b32.xlu0 %v1003, 16
    %v1939 = vpop.permute.xlu0 %1938
    %1956 = vrot.lane.b32.xlu0 %v1423, 32
    %v1957 = vpop.permute.xlu0 %1956
    %1958 = vrot.lane.b32.xlu0 %v1428, 32
    %v1959 = vpop.permute.xlu0 %1958
    %1960 = vrot.lane.b32.xlu0 %v1433, 32
    %v1961 = vpop.permute.xlu0 %1960
    %1962 = vrot.lane.b32.xlu0 %v1438, 32
    %v1963 = vpop.permute.xlu0 %1962
    %1964 = vrot.lane.b32.xlu0 %v1443, 32
    %v1965 = vpop.permute.xlu0 %1964
    %1966 = vrot.lane.b32.xlu0 %v1448, 32
    %v1967 = vpop.permute.xlu0 %1966
    %1968 = vrot.lane.b32.xlu0 %v1453, 32
    %v1969 = vpop.permute.xlu0 %1968
    %1970 = vrot.lane.b32.xlu0 %v1458, 32
    %v1971 = vpop.permute.xlu0 %1970
    %1988 = vrot.lane.b32.xlu0 %v1878, 48
    %v1989 = vpop.permute.xlu0 %1988
    %1990 = vrot.lane.b32.xlu0 %v1883, 48
    %v1991 = vpop.permute.xlu0 %1990
    %1992 = vrot.lane.b32.xlu0 %v1888, 48
    %v1993 = vpop.permute.xlu0 %1992
    %1994 = vrot.lane.b32.xlu0 %v1893, 48
    %v1995 = vpop.permute.xlu0 %1994
    %1996 = vrot.lane.b32.xlu0 %v1898, 48
    %v1997 = vpop.permute.xlu0 %1996
    %1998 = vrot.lane.b32.xlu0 %v1903, 48
    %v1999 = vpop.permute.xlu0 %1998
    %2000 = vrot.lane.b32.xlu0 %v1908, 48
    %v2001 = vpop.permute.xlu0 %2000
    %2002 = vrot.lane.b32.xlu0 %v1913, 48
    %v2003 = vpop.permute.xlu0 %2002
    %v2012 = vsel %vm195, %v505, %v1925
    %v2013 = vsel %vm195, %v510, %v1927
    %v2014 = vsel %vm195, %v515, %v1929
    %v2015 = vsel %vm195, %v520, %v1931
    %v2016 = vsel %vm195, %v525, %v1933
    %v2017 = vsel %vm195, %v530, %v1935
    %v2018 = vsel %vm195, %v535, %v1937
    %v2019 = vsel %vm195, %v540, %v1939
    %v2020 = vsel %vm36, %v2012, %v1957
    %v2021 = vsel %vm36, %v2013, %v1959
    %v2022 = vsel %vm36, %v2014, %v1961
    %v2023 = vsel %vm36, %v2015, %v1963
    %v2024 = vsel %vm36, %v2016, %v1965
    %v2025 = vsel %vm36, %v2017, %v1967
    %v2026 = vsel %vm36, %v2018, %v1969
    %v2027 = vsel %vm36, %v2019, %v1971
    %vm2028 = vcmask 392192
    %v2029 = vsel %vm2028, %v2020, %v1989
    %v2030 = vsel %vm2028, %v2021, %v1991
    %v2031 = vsel %vm2028, %v2022, %v1993
    %v2032 = vsel %vm2028, %v2023, %v1995
    %v2033 = vsel %vm2028, %v2024, %v1997
    %v2034 = vsel %vm2028, %v2025, %v1999
    %v2035 = vsel %vm2028, %v2026, %v2001
    %v2036 = vsel %vm2028, %v2027, %v2003
    %v2037 = vld [vmem:[%s5] sm:$0x1]
    %v2039 = vlaneseq
    %v2040 = vshrl.u32 %v2039, 7
    %v2041 = vsub.s32 0, %v2040
    %v2042 = vrot.slane %v2037, %v2041
    %v2044 = vadd.f32 %v2029, %v2042
    %v2045 = vadd.f32 %v2030, %v2042
    %v2046 = vadd.f32 %v2031, %v2042
    %v2047 = vadd.f32 %v2032, %v2042
    %v2048 = vadd.f32 %v2033, %v2042
    %v2049 = vadd.f32 %v2034, %v2042
    %v2050 = vadd.f32 %v2035, %v2042
    %v2051 = vadd.f32 %v2036, %v2042
    %2052 = vst.msk [vmem:[#allocation2] sm:$0xff] %vm325, %v2044
    %2053 = vst.msk [vmem:[#allocation2 + $0x8] sm:$0xff] %vm325, %v2045
    %2054 = vst.msk [vmem:[#allocation2 + $0x10] sm:$0xff] %vm325, %v2046
    %2055 = vst.msk [vmem:[#allocation2 + $0x18] sm:$0xff] %vm325, %v2047
    %2056 = vst.msk [vmem:[#allocation2 + $0x20] sm:$0xff] %vm325, %v2048
    %2057 = vst.msk [vmem:[#allocation2 + $0x28] sm:$0xff] %vm325, %v2049
    %2058 = vst.msk [vmem:[#allocation2 + $0x30] sm:$0xff] %vm325, %v2050
    %2059 = vst.msk [vmem:[#allocation2 + $0x38] sm:$0xff] %vm325, %v2051
    // Predicated region
    $region26: #{gat_forward.1} parent=1 // pred_check
      _
    $region27: #{gat_forward.1} parent=1 // pred_check_branch
      %2061 = sbr.rel (0) target = $region29
    $region28: #{gat_forward.1} parent=1 // pred_region
      %s2063 = ssub.s32 1024, 1024
      %2064 = vsyncadd [#allocation3], %s2063
      %s2065 = sshll.u32 [#allocation2], 4
      %s2066 = int_to_ptr.vmem [resolvable:$true] %s2065
      %2071 = dma.vmem_to_hbm [thread:$0]  %s2066, 1024, %s6, [#allocation3], 128, 128, 8
    $region29: #{gat_forward.1} parent=1 // pred_fallthru
      _
    // Predicated region
    $region30: #{gat_forward.1} parent=1 // pred_check
      _
    $region31: #{gat_forward.1} parent=1 // pred_check_branch
      %2073 = sbr.rel (0) target = $region33
    $region32: #{gat_forward.1} parent=1 // pred_region
      %2074 = dma.done [#allocation3], 1024
    $region33: #{gat_forward.1} parent=1 // pred_fallthru
      _
    %2075 = vsyncpa [#allocation3], 1

</llo_original>
